<compile_context>
chip_gen: v5e
topology: v5e:2x2
jax: 0.10.0
libtpu: 0.0.40
codegen_flags: <defaults>
</compile_context>

<pallas_src>
import jax
import jax.numpy as jnp
from jax.experimental import pallas as pl
from jax.experimental.pallas import tpu as pltpu

BN_EPS = 1e-5
BN_MOMENTUM = 0.1  # only affects training-time running-stat updates; eval forward ignores it.


def _round_up(x, m):
    return ((x + m - 1) // m) * m


def _conv3x3_bn_relu_kernel(x_ref, w_ref, scale_ref, shift_ref, o_ref, acc_ref):
    # x_ref:     (TH + 2, W, Cin)  f32  input rows with a 1-row halo above/below; W NOT padded
    # w_ref:     (9, Cin, Cho_p)   bf16 conv taps, tap index = kh * 3 + kw, Cho padded to 128x
    # scale_ref: (1, Cho_p)        f32  gamma / sqrt(running_var + eps)
    # shift_ref: (1, Cho_p)        f32  beta + (conv_bias - running_mean) * scale
    # o_ref:     (TH, W, Cho_p)    output tile
    # acc_ref:   (TH * W, Cho_p)   f32  VMEM scratch accumulator
    TH, W, Cho_p = o_ref.shape
    Cin = x_ref.shape[-1]
    M = TH * W                 # flattened rows of the output tile
    MT = (TH + 2) * W          # flattened rows of the input tile (incl. halo)

    # Flatten (rows, W) onto the sublane axis once (layout-free when W % 8 == 0).
    x2 = x_ref[...].reshape(MT, Cin)

    # Column index (0..W-1) of every flattened row, for masking the horizontal border.
    col = jax.lax.broadcasted_iota(jnp.int32, (TH + 2, W, 1), 1).reshape(MT, 1)

    # Horizontal (kw) taps via sublane rotations (XLU slot, co-issues with the MXU) plus
    # border masking, instead of three off-by-one W slices (each a VMEM relayout copy).
    #   kw = 0 needs x[.., w-1, :] -> roll towards higher indices by 1,      zero column 0
    #   kw = 1 needs x[.., w,   :]
    #   kw = 2 needs x[.., w+1, :] -> roll towards lower indices (shift MT-1), zero column W-1
    # Rolling the *flattened* rows only wraps at positions that are masked to zero anyway.
    left = jnp.where(col == 0, 0.0, pltpu.roll(x2, 1, 0))
    right = jnp.where(col == W - 1, 0.0, pltpu.roll(x2, MT - 1, 0))
    taps_w = (left.astype(jnp.bfloat16),    # kw = 0
              x2.astype(jnp.bfloat16),      # kw = 1
              right.astype(jnp.bfloat16))   # kw = 2

    acc_ref[...] = jnp.zeros_like(acc_ref)
    for kw in range(3):
        t = taps_w[kw]
        for kh in range(3):
            # Vertical (kh) tap = slice at flattened-row offset kh*W (aligned, no relayout
            # when W is a multiple of the sublane tile).
            lhs = t[kh * W:kh * W + M, :]
            # bf16 x bf16 -> f32 accumulate on the MXU, into the explicit VMEM scratch.
            acc_ref[...] += jnp.dot(lhs, w_ref[kh * 3 + kw],
                                    preferred_element_type=jnp.float32)
    # NOTE: for Cin < 128 one can additionally fatten K by concatenating the three kh taps
    # along the contraction axis (3 matmuls of K=3*Cin instead of 9 of K=Cin).

    # Fused BatchNorm(eval, bias folded) + ReLU epilogue, f32, then lane-dense store.
    y = acc_ref[...] * scale_ref[...] + shift_ref[...]
    y = jnp.maximum(y, 0.0)
    o_ref[...] = y.reshape(TH, W, Cho_p).astype(o_ref.dtype)


def deform_conv_forward(x_nchw, weight, bias, gamma, beta, running_mean, running_var,
                        *, tile_h=8):
    """Forward of DeformConv: conv3x3(stride=1, pad=1) -> BatchNorm2d(eval) -> ReLU.

    x_nchw: (N, Cin, H, W) f32;  weight: (Cho, Cin, 3, 3) (PyTorch OIHW); others: (Cho,)
    returns (N, Cho, H, W) f32.
    """
    N, Cin, H, W = x_nchw.shape
    Cho = weight.shape[0]
    Cho_p = _round_up(Cho, 128)          # lane-dense output stores / matmul N dim
    th = max(1, min(tile_h, H))          # H tile size; size for VMEM budget at real shapes
    nH = pl.cdiv(H, th)
    H_pad = nH * th

    # NCHW -> NHWC (channels on the lane axis).
    # NOTE: if the surrounding model keeps NHWC activations, this transpose and the matching
    # one on the output disappear (they are interface plumbing, not part of the kernel).
    x = jnp.transpose(x_nchw, (0, 2, 3, 1))

    # Overlapping H-tiles with a 1-row zero halo per side. This *replaces* the plain pad pass
    # (a single HBM pass, ~(th+2)/th of the input) and lets every grid step use a simple,
    # non-overlapping Blocked BlockSpec. W is left unpadded: horizontal taps use pltpu.roll.
    x_hp = jnp.pad(x, ((0, 0), (1, 1 + (H_pad - H)), (0, 0), (0, 0)))
    x_tiles = jnp.stack([x_hp[:, i * th:i * th + th + 2] for i in range(nH)], axis=1)
    # -> (N, nH, th + 2, W, Cin)

    # (Cho, Cin, 3, 3) -> (9, Cin, Cho_p) bf16 MXU weights, tap index = kh*3 + kw.
    w = jnp.transpose(weight, (2, 3, 1, 0)).reshape(9, Cin, Cho)
    w = jnp.pad(w, ((0, 0), (0, 0), (0, Cho_p - Cho))).astype(jnp.bfloat16)

    # Fold BN (eval semantics) and the conv bias into a single per-channel scale/shift.
    scale = gamma / jnp.sqrt(running_var + BN_EPS)
    shift = beta + (bias - running_mean) * scale
    scale = jnp.pad(scale, (0, Cho_p - Cho)).reshape(1, Cho_p).astype(jnp.float32)
    shift = jnp.pad(shift, (0, Cho_p - Cho)).reshape(1, Cho_p).astype(jnp.float32)

    out = pl.pallas_call(
        _conv3x3_bn_relu_kernel,
        out_shape=jax.ShapeDtypeStruct((N, H_pad, W, Cho_p), x.dtype),
        grid_spec=pltpu.PrefetchScalarGridSpec(
            num_scalar_prefetch=0,
            grid=(N, nH),
            in_specs=[
                pl.BlockSpec((None, None, th + 2, W, Cin), lambda n, i: (n, i, 0, 0, 0)),
                pl.BlockSpec((9, Cin, Cho_p), lambda n, i: (0, 0, 0)),
                pl.BlockSpec((1, Cho_p), lambda n, i: (0, 0)),
                pl.BlockSpec((1, Cho_p), lambda n, i: (0, 0)),
            ],
            out_specs=pl.BlockSpec((None, th, W, Cho_p), lambda n, i: (n, i, 0, 0)),
            scratch_shapes=[pltpu.VMEM((th * W, Cho_p), jnp.float32)],
        ),
        compiler_params=pltpu.CompilerParams(
            dimension_semantics=("parallel", "parallel"),
            # v7x has only 64 MiB physical VMEM: keep 2*(input tile + output tile) + weights
            # + f32 accumulator comfortably under this scoped budget when sizing tile_h.
            vmem_limit_bytes=32 * 1024 * 1024,
        ),
    )(x_tiles, w, scale, shift)

    out = out[:, :H, :, :Cho]            # drop H-rounding rows and Cho lane padding
    return jnp.transpose(out, (0, 3, 1, 2))   # NHWC -> NCHW


def _reference(x_nchw, weight, bias, gamma, beta, running_mean, running_var,
               operand_dtype=jnp.float32):
    """Plain-JAX reference: conv3x3(pad=1) -> BN(eval) -> ReLU.

    operand_dtype=bf16 mirrors the kernel's MXU arithmetic (bf16 operands, f32 accumulation).
    """
    y = jax.lax.conv_general_dilated(
        x_nchw.astype(operand_dtype), weight.astype(operand_dtype),
        window_strides=(1, 1), padding=((1, 1), (1, 1)),
        dimension_numbers=("NCHW", "OIHW", "NCHW"),
        preferred_element_type=jnp.float32)
    y = y + bias[None, :, None, None]
    scale = gamma / jnp.sqrt(running_var + BN_EPS)
    y = (y - running_mean[None, :, None, None]) * scale[None, :, None, None] \
        + beta[None, :, None, None]
    return jnp.maximum(y, 0.0)


if __name__ == "__main__":
    key = jax.random.PRNGKey(0)
    kx, kw_, kb, kg, kbe, km, kv = jax.random.split(key, 7)

    N, Cin, Cho, H, W = 2, 4, 8, 16, 16

    x = jax.random.normal(kx, (N, Cin, H, W), jnp.float32)
    # Deterministic synthetic parameters (nn.Conv2d(chi, cho, 3) + nn.BatchNorm2d(cho)).
    weight = 0.1 * jax.random.normal(kw_, (Cho, Cin, 3, 3), jnp.float32)
    bias = 0.1 * jax.random.normal(kb, (Cho,), jnp.float32)
    gamma = 1.0 + 0.05 * jax.random.normal(kg, (Cho,), jnp.float32)
    beta = 0.05 * jax.random.normal(kbe, (Cho,), jnp.float32)
    running_mean = 0.05 * jax.random.normal(km, (Cho,), jnp.float32)
    running_var = 1.0 + 0.1 * jax.nn.softplus(jax.random.normal(kv, (Cho,), jnp.float32))

    out = deform_conv_forward(x, weight, bias, gamma, beta, running_mean, running_var,
                              tile_h=8)
    out = jax.block_until_ready(out)
    assert out.shape == (N, Cho, H, W)

    # Tight check vs a reference using the same arithmetic as the kernel's MXU path
    # (bf16 multiply operands, f32 accumulation).
    ref_bf16 = _reference(x, weight, bias, gamma, beta, running_mean, running_var,
                          operand_dtype=jnp.bfloat16)
    assert jnp.max(jnp.abs(out - ref_bf16)) < 2e-3

    # Loose check vs the full-f32 reference (difference is only bf16 operand rounding).
    ref_f32 = _reference(x, weight, bias, gamma, beta, running_mean, running_var)
    assert jnp.max(jnp.abs(out - ref_f32)) < 5e-2

    print("KERNEL_OK")
</pallas_src>

<mosaic_0001>
module attributes {stable_mosaic.version = 11 : i64} {
  func.func @_conv3x3_bn_relu_kernel(%arg0: i32, %arg1: i32, %arg2: memref<1x1x10x16x4xf32, #tpu.memory_space<vmem>>, %arg3: memref<9x4x128xbf16, #tpu.memory_space<vmem>>, %arg4: memref<1x128xf32, #tpu.memory_space<vmem>>, %arg5: memref<1x128xf32, #tpu.memory_space<vmem>>, %arg6: memref<1x8x16x128xf32, #tpu.memory_space<vmem>>, %arg7: memref<128x128xf32, #tpu.memory_space<vmem>>) attributes {dimension_semantics = [#tpu.dimension_semantics<parallel>, #tpu.dimension_semantics<parallel>], iteration_bounds = array<i64: 2, 2>, scalar_prefetch = 0 : i64, scratch_operands = 1 : i64, tpu.core_type = #tpu.core_type<tc>, window_params = [{transform_indices = @transform_0, window_bounds = array<i64: 1, 1, 10, 16, 4>}, {pipeline_mode = #tpu.pipeline_mode<synchronous>, transform_indices = @transform_1, window_bounds = array<i64: 9, 4, 128>}, {pipeline_mode = #tpu.pipeline_mode<synchronous>, transform_indices = @transform_2, window_bounds = array<i64: 1, 128>}, {pipeline_mode = #tpu.pipeline_mode<synchronous>, transform_indices = @transform_3, window_bounds = array<i64: 1, 128>}, {transform_indices = @transform_4, window_bounds = array<i64: 1, 8, 16, 128>}]} {
    %c0 = arith.constant 0 : index
    %c0_0 = arith.constant 0 : index
    %c0_1 = arith.constant 0 : index
    %c0_2 = arith.constant 0 : index
    %c0_3 = arith.constant 0 : index
    %0 = vector.load %arg2[%c0, %c0_0, %c0_1, %c0_2, %c0_3] : memref<1x1x10x16x4xf32, #tpu.memory_space<vmem>>, vector<1x1x10x16x4xf32>
    %1 = vector.shape_cast %0 : vector<1x1x10x16x4xf32> to vector<10x16x4xf32>
    %2 = vector.shape_cast %1 : vector<10x16x4xf32> to vector<160x4xf32>
    %3 = tpu.iota {dimensions = array<i32: 1>} : vector<10x16x1xi32>
    %4 = vector.shape_cast %3 : vector<10x16x1xi32> to vector<160x1xi32>
    %c0_i32 = arith.constant 0 : i32
    %5 = vector.broadcast %c0_i32 : i32 to vector<160x1xi32>
    %6 = arith.cmpi eq, %4, %5 : vector<160x1xi32>
    %c1_i32 = arith.constant 1 : i32
    %7 = tpu.dynamic_rotate %2 by %c1_i32 dim 0 : vector<160x4xf32>, i32 -> vector<160x4xf32>
    %cst = arith.constant 0.000000e+00 : f32
    %8 = vector.shape_cast %6 : vector<160x1xi1> to vector<160x1xi1>
    %9 = vector.broadcast %8 : vector<160x1xi1> to vector<160x4xi1>
    %10 = vector.broadcast %cst : f32 to vector<160x4xf32>
    %11 = arith.select %9, %10, %7 : vector<160x4xi1>, vector<160x4xf32>
    %c15_i32 = arith.constant 15 : i32
    %12 = vector.broadcast %c15_i32 : i32 to vector<160x1xi32>
    %13 = arith.cmpi eq, %4, %12 : vector<160x1xi32>
    %c159_i32 = arith.constant 159 : i32
    %14 = tpu.dynamic_rotate %2 by %c159_i32 dim 0 : vector<160x4xf32>, i32 -> vector<160x4xf32>
    %cst_4 = arith.constant 0.000000e+00 : f32
    %15 = vector.shape_cast %13 : vector<160x1xi1> to vector<160x1xi1>
    %16 = vector.broadcast %15 : vector<160x1xi1> to vector<160x4xi1>
    %17 = vector.broadcast %cst_4 : f32 to vector<160x4xf32>
    %18 = arith.select %16, %17, %14 : vector<160x4xi1>, vector<160x4xf32>
    %19 = arith.truncf %11 : vector<160x4xf32> to vector<160x4xbf16>
    %20 = arith.truncf %2 : vector<160x4xf32> to vector<160x4xbf16>
    %21 = arith.truncf %18 : vector<160x4xf32> to vector<160x4xbf16>
    %cst_5 = arith.constant 0.000000e+00 : f32
    %22 = vector.broadcast %cst_5 : f32 to vector<128x128xf32>
    %c0_6 = arith.constant 0 : index
    %c0_7 = arith.constant 0 : index
    %23 = vector.load %arg7[%c0_6, %c0_7] : memref<128x128xf32, #tpu.memory_space<vmem>>, vector<128x128xf32>
    tpu.vector_store %arg7[%c0_6, %c0_7], %22 {strides = array<i32>} : memref<128x128xf32, #tpu.memory_space<vmem>>, vector<128x128xf32>,
    %24 = vector.extract_strided_slice %19 {offsets = [0, 0], sizes = [128, 4], strides = [1, 1]} : vector<160x4xbf16> to vector<128x4xbf16>
    %c0_8 = arith.constant 0 : index
    %c0_9 = arith.constant 0 : index
    %25 = vector.load %arg7[%c0_8, %c0_9] : memref<128x128xf32, #tpu.memory_space<vmem>>, vector<128x128xf32>
    %c0_10 = arith.constant 0 : index
    %c0_11 = arith.constant 0 : index
    %c0_12 = arith.constant 0 : index
    %26 = vector.load %arg3[%c0_10, %c0_11, %c0_12] : memref<9x4x128xbf16, #tpu.memory_space<vmem>>, vector<1x4x128xbf16>
    %27 = vector.shape_cast %26 : vector<1x4x128xbf16> to vector<4x128xbf16>
    %cst_13 = arith.constant dense<0.000000e+00> : vector<128x128xf32>
    %28 = tpu.matmul %24, %27, %cst_13 {dimension_numbers = #tpu.dot_dimension_numbers<[1], [0], [0], [1], [0, 0, 1, 1], [], []>} : vector<128x4xbf16>, vector<4x128xbf16>, vector<128x128xf32> -> vector<128x128xf32>
    %29 = arith.addf %25, %28 : vector<128x128xf32>
    %c0_14 = arith.constant 0 : index
    %c0_15 = arith.constant 0 : index
    %30 = vector.load %arg7[%c0_14, %c0_15] : memref<128x128xf32, #tpu.memory_space<vmem>>, vector<128x128xf32>
    tpu.vector_store %arg7[%c0_14, %c0_15], %29 {strides = array<i32>} : memref<128x128xf32, #tpu.memory_space<vmem>>, vector<128x128xf32>,
    %31 = vector.extract_strided_slice %19 {offsets = [16, 0], sizes = [128, 4], strides = [1, 1]} : vector<160x4xbf16> to vector<128x4xbf16>
    %c0_16 = arith.constant 0 : index
    %c0_17 = arith.constant 0 : index
    %32 = vector.load %arg7[%c0_16, %c0_17] : memref<128x128xf32, #tpu.memory_space<vmem>>, vector<128x128xf32>
    %c3 = arith.constant 3 : index
    %c0_18 = arith.constant 0 : index
    %c0_19 = arith.constant 0 : index
    %33 = vector.load %arg3[%c3, %c0_18, %c0_19] : memref<9x4x128xbf16, #tpu.memory_space<vmem>>, vector<1x4x128xbf16>
    %34 = vector.shape_cast %33 : vector<1x4x128xbf16> to vector<4x128xbf16>
    %cst_20 = arith.constant dense<0.000000e+00> : vector<128x128xf32>
    %35 = tpu.matmul %31, %34, %cst_20 {dimension_numbers = #tpu.dot_dimension_numbers<[1], [0], [0], [1], [0, 0, 1, 1], [], []>} : vector<128x4xbf16>, vector<4x128xbf16>, vector<128x128xf32> -> vector<128x128xf32>
    %36 = arith.addf %32, %35 : vector<128x128xf32>
    %c0_21 = arith.constant 0 : index
    %c0_22 = arith.constant 0 : index
    %37 = vector.load %arg7[%c0_21, %c0_22] : memref<128x128xf32, #tpu.memory_space<vmem>>, vector<128x128xf32>
    tpu.vector_store %arg7[%c0_21, %c0_22], %36 {strides = array<i32>} : memref<128x128xf32, #tpu.memory_space<vmem>>, vector<128x128xf32>,
    %38 = vector.extract_strided_slice %19 {offsets = [32, 0], sizes = [128, 4], strides = [1, 1]} : vector<160x4xbf16> to vector<128x4xbf16>
    %c0_23 = arith.constant 0 : index
    %c0_24 = arith.constant 0 : index
    %39 = vector.load %arg7[%c0_23, %c0_24] : memref<128x128xf32, #tpu.memory_space<vmem>>, vector<128x128xf32>
    %c6 = arith.constant 6 : index
    %c0_25 = arith.constant 0 : index
    %c0_26 = arith.constant 0 : index
    %40 = vector.load %arg3[%c6, %c0_25, %c0_26] : memref<9x4x128xbf16, #tpu.memory_space<vmem>>, vector<1x4x128xbf16>
    %41 = vector.shape_cast %40 : vector<1x4x128xbf16> to vector<4x128xbf16>
    %cst_27 = arith.constant dense<0.000000e+00> : vector<128x128xf32>
    %42 = tpu.matmul %38, %41, %cst_27 {dimension_numbers = #tpu.dot_dimension_numbers<[1], [0], [0], [1], [0, 0, 1, 1], [], []>} : vector<128x4xbf16>, vector<4x128xbf16>, vector<128x128xf32> -> vector<128x128xf32>
    %43 = arith.addf %39, %42 : vector<128x128xf32>
    %c0_28 = arith.constant 0 : index
    %c0_29 = arith.constant 0 : index
    %44 = vector.load %arg7[%c0_28, %c0_29] : memref<128x128xf32, #tpu.memory_space<vmem>>, vector<128x128xf32>
    tpu.vector_store %arg7[%c0_28, %c0_29], %43 {strides = array<i32>} : memref<128x128xf32, #tpu.memory_space<vmem>>, vector<128x128xf32>,
    %45 = vector.extract_strided_slice %20 {offsets = [0, 0], sizes = [128, 4], strides = [1, 1]} : vector<160x4xbf16> to vector<128x4xbf16>
    %c0_30 = arith.constant 0 : index
    %c0_31 = arith.constant 0 : index
    %46 = vector.load %arg7[%c0_30, %c0_31] : memref<128x128xf32, #tpu.memory_space<vmem>>, vector<128x128xf32>
    %c1 = arith.constant 1 : index
    %c0_32 = arith.constant 0 : index
    %c0_33 = arith.constant 0 : index
    %47 = vector.load %arg3[%c1, %c0_32, %c0_33] : memref<9x4x128xbf16, #tpu.memory_space<vmem>>, vector<1x4x128xbf16>
    %48 = vector.shape_cast %47 : vector<1x4x128xbf16> to vector<4x128xbf16>
    %cst_34 = arith.constant dense<0.000000e+00> : vector<128x128xf32>
    %49 = tpu.matmul %45, %48, %cst_34 {dimension_numbers = #tpu.dot_dimension_numbers<[1], [0], [0], [1], [0, 0, 1, 1], [], []>} : vector<128x4xbf16>, vector<4x128xbf16>, vector<128x128xf32> -> vector<128x128xf32>
    %50 = arith.addf %46, %49 : vector<128x128xf32>
    %c0_35 = arith.constant 0 : index
    %c0_36 = arith.constant 0 : index
    %51 = vector.load %arg7[%c0_35, %c0_36] : memref<128x128xf32, #tpu.memory_space<vmem>>, vector<128x128xf32>
    tpu.vector_store %arg7[%c0_35, %c0_36], %50 {strides = array<i32>} : memref<128x128xf32, #tpu.memory_space<vmem>>, vector<128x128xf32>,
    %52 = vector.extract_strided_slice %20 {offsets = [16, 0], sizes = [128, 4], strides = [1, 1]} : vector<160x4xbf16> to vector<128x4xbf16>
    %c0_37 = arith.constant 0 : index
    %c0_38 = arith.constant 0 : index
    %53 = vector.load %arg7[%c0_37, %c0_38] : memref<128x128xf32, #tpu.memory_space<vmem>>, vector<128x128xf32>
    %c4 = arith.constant 4 : index
    %c0_39 = arith.constant 0 : index
    %c0_40 = arith.constant 0 : index
    %54 = vector.load %arg3[%c4, %c0_39, %c0_40] : memref<9x4x128xbf16, #tpu.memory_space<vmem>>, vector<1x4x128xbf16>
    %55 = vector.shape_cast %54 : vector<1x4x128xbf16> to vector<4x128xbf16>
    %cst_41 = arith.constant dense<0.000000e+00> : vector<128x128xf32>
    %56 = tpu.matmul %52, %55, %cst_41 {dimension_numbers = #tpu.dot_dimension_numbers<[1], [0], [0], [1], [0, 0, 1, 1], [], []>} : vector<128x4xbf16>, vector<4x128xbf16>, vector<128x128xf32> -> vector<128x128xf32>
    %57 = arith.addf %53, %56 : vector<128x128xf32>
    %c0_42 = arith.constant 0 : index
    %c0_43 = arith.constant 0 : index
    %58 = vector.load %arg7[%c0_42, %c0_43] : memref<128x128xf32, #tpu.memory_space<vmem>>, vector<128x128xf32>
    tpu.vector_store %arg7[%c0_42, %c0_43], %57 {strides = array<i32>} : memref<128x128xf32, #tpu.memory_space<vmem>>, vector<128x128xf32>,
    %59 = vector.extract_strided_slice %20 {offsets = [32, 0], sizes = [128, 4], strides = [1, 1]} : vector<160x4xbf16> to vector<128x4xbf16>
    %c0_44 = arith.constant 0 : index
    %c0_45 = arith.constant 0 : index
    %60 = vector.load %arg7[%c0_44, %c0_45] : memref<128x128xf32, #tpu.memory_space<vmem>>, vector<128x128xf32>
    %c7 = arith.constant 7 : index
    %c0_46 = arith.constant 0 : index
    %c0_47 = arith.constant 0 : index
    %61 = vector.load %arg3[%c7, %c0_46, %c0_47] : memref<9x4x128xbf16, #tpu.memory_space<vmem>>, vector<1x4x128xbf16>
    %62 = vector.shape_cast %61 : vector<1x4x128xbf16> to vector<4x128xbf16>
    %cst_48 = arith.constant dense<0.000000e+00> : vector<128x128xf32>
    %63 = tpu.matmul %59, %62, %cst_48 {dimension_numbers = #tpu.dot_dimension_numbers<[1], [0], [0], [1], [0, 0, 1, 1], [], []>} : vector<128x4xbf16>, vector<4x128xbf16>, vector<128x128xf32> -> vector<128x128xf32>
    %64 = arith.addf %60, %63 : vector<128x128xf32>
    %c0_49 = arith.constant 0 : index
    %c0_50 = arith.constant 0 : index
    %65 = vector.load %arg7[%c0_49, %c0_50] : memref<128x128xf32, #tpu.memory_space<vmem>>, vector<128x128xf32>
    tpu.vector_store %arg7[%c0_49, %c0_50], %64 {strides = array<i32>} : memref<128x128xf32, #tpu.memory_space<vmem>>, vector<128x128xf32>,
    %66 = vector.extract_strided_slice %21 {offsets = [0, 0], sizes = [128, 4], strides = [1, 1]} : vector<160x4xbf16> to vector<128x4xbf16>
    %c0_51 = arith.constant 0 : index
    %c0_52 = arith.constant 0 : index
    %67 = vector.load %arg7[%c0_51, %c0_52] : memref<128x128xf32, #tpu.memory_space<vmem>>, vector<128x128xf32>
    %c2 = arith.constant 2 : index
    %c0_53 = arith.constant 0 : index
    %c0_54 = arith.constant 0 : index
    %68 = vector.load %arg3[%c2, %c0_53, %c0_54] : memref<9x4x128xbf16, #tpu.memory_space<vmem>>, vector<1x4x128xbf16>
    %69 = vector.shape_cast %68 : vector<1x4x128xbf16> to vector<4x128xbf16>
    %cst_55 = arith.constant dense<0.000000e+00> : vector<128x128xf32>
    %70 = tpu.matmul %66, %69, %cst_55 {dimension_numbers = #tpu.dot_dimension_numbers<[1], [0], [0], [1], [0, 0, 1, 1], [], []>} : vector<128x4xbf16>, vector<4x128xbf16>, vector<128x128xf32> -> vector<128x128xf32>
    %71 = arith.addf %67, %70 : vector<128x128xf32>
    %c0_56 = arith.constant 0 : index
    %c0_57 = arith.constant 0 : index
    %72 = vector.load %arg7[%c0_56, %c0_57] : memref<128x128xf32, #tpu.memory_space<vmem>>, vector<128x128xf32>
    tpu.vector_store %arg7[%c0_56, %c0_57], %71 {strides = array<i32>} : memref<128x128xf32, #tpu.memory_space<vmem>>, vector<128x128xf32>,
    %73 = vector.extract_strided_slice %21 {offsets = [16, 0], sizes = [128, 4], strides = [1, 1]} : vector<160x4xbf16> to vector<128x4xbf16>
    %c0_58 = arith.constant 0 : index
    %c0_59 = arith.constant 0 : index
    %74 = vector.load %arg7[%c0_58, %c0_59] : memref<128x128xf32, #tpu.memory_space<vmem>>, vector<128x128xf32>
    %c5 = arith.constant 5 : index
    %c0_60 = arith.constant 0 : index
    %c0_61 = arith.constant 0 : index
    %75 = vector.load %arg3[%c5, %c0_60, %c0_61] : memref<9x4x128xbf16, #tpu.memory_space<vmem>>, vector<1x4x128xbf16>
    %76 = vector.shape_cast %75 : vector<1x4x128xbf16> to vector<4x128xbf16>
    %cst_62 = arith.constant dense<0.000000e+00> : vector<128x128xf32>
    %77 = tpu.matmul %73, %76, %cst_62 {dimension_numbers = #tpu.dot_dimension_numbers<[1], [0], [0], [1], [0, 0, 1, 1], [], []>} : vector<128x4xbf16>, vector<4x128xbf16>, vector<128x128xf32> -> vector<128x128xf32>
    %78 = arith.addf %74, %77 : vector<128x128xf32>
    %c0_63 = arith.constant 0 : index
    %c0_64 = arith.constant 0 : index
    %79 = vector.load %arg7[%c0_63, %c0_64] : memref<128x128xf32, #tpu.memory_space<vmem>>, vector<128x128xf32>
    tpu.vector_store %arg7[%c0_63, %c0_64], %78 {strides = array<i32>} : memref<128x128xf32, #tpu.memory_space<vmem>>, vector<128x128xf32>,
    %80 = vector.extract_strided_slice %21 {offsets = [32, 0], sizes = [128, 4], strides = [1, 1]} : vector<160x4xbf16> to vector<128x4xbf16>
    %c0_65 = arith.constant 0 : index
    %c0_66 = arith.constant 0 : index
    %81 = vector.load %arg7[%c0_65, %c0_66] : memref<128x128xf32, #tpu.memory_space<vmem>>, vector<128x128xf32>
    %c8 = arith.constant 8 : index
    %c0_67 = arith.constant 0 : index
    %c0_68 = arith.constant 0 : index
    %82 = vector.load %arg3[%c8, %c0_67, %c0_68] : memref<9x4x128xbf16, #tpu.memory_space<vmem>>, vector<1x4x128xbf16>
    %83 = vector.shape_cast %82 : vector<1x4x128xbf16> to vector<4x128xbf16>
    %cst_69 = arith.constant dense<0.000000e+00> : vector<128x128xf32>
    %84 = tpu.matmul %80, %83, %cst_69 {dimension_numbers = #tpu.dot_dimension_numbers<[1], [0], [0], [1], [0, 0, 1, 1], [], []>} : vector<128x4xbf16>, vector<4x128xbf16>, vector<128x128xf32> -> vector<128x128xf32>
    %85 = arith.addf %81, %84 : vector<128x128xf32>
    %c0_70 = arith.constant 0 : index
    %c0_71 = arith.constant 0 : index
    %86 = vector.load %arg7[%c0_70, %c0_71] : memref<128x128xf32, #tpu.memory_space<vmem>>, vector<128x128xf32>
    tpu.vector_store %arg7[%c0_70, %c0_71], %85 {strides = array<i32>} : memref<128x128xf32, #tpu.memory_space<vmem>>, vector<128x128xf32>,
    %c0_72 = arith.constant 0 : index
    %c0_73 = arith.constant 0 : index
    %87 = vector.load %arg7[%c0_72, %c0_73] : memref<128x128xf32, #tpu.memory_space<vmem>>, vector<128x128xf32>
    %c0_74 = arith.constant 0 : index
    %c0_75 = arith.constant 0 : index
    %88 = vector.load %arg4[%c0_74, %c0_75] : memref<1x128xf32, #tpu.memory_space<vmem>>, vector<1x128xf32>
    %89 = vector.broadcast %88 : vector<1x128xf32> to vector<128x128xf32>
    %90 = arith.mulf %87, %89 : vector<128x128xf32>
    %c0_76 = arith.constant 0 : index
    %c0_77 = arith.constant 0 : index
    %91 = vector.load %arg5[%c0_76, %c0_77] : memref<1x128xf32, #tpu.memory_space<vmem>>, vector<1x128xf32>
    %92 = vector.broadcast %91 : vector<1x128xf32> to vector<128x128xf32>
    %93 = arith.addf %90, %92 : vector<128x128xf32>
    %cst_78 = arith.constant 0.000000e+00 : f32
    %94 = vector.broadcast %cst_78 : f32 to vector<128x128xf32>
    %95 = arith.maximumf %93, %94 : vector<128x128xf32>
    %96 = vector.shape_cast %95 : vector<128x128xf32> to vector<8x16x128xf32>
    %c0_79 = arith.constant 0 : index
    %c0_80 = arith.constant 0 : index
    %c0_81 = arith.constant 0 : index
    %c0_82 = arith.constant 0 : index
    %97 = vector.load %arg6[%c0_79, %c0_80, %c0_81, %c0_82] : memref<1x8x16x128xf32, #tpu.memory_space<vmem>>, vector<1x8x16x128xf32>
    %98 = vector.shape_cast %97 : vector<1x8x16x128xf32> to vector<8x16x128xf32>
    %99 = vector.shape_cast %96 : vector<8x16x128xf32> to vector<1x8x16x128xf32>
    tpu.vector_store %arg6[%c0_79, %c0_80, %c0_81, %c0_82], %99 {strides = array<i32>} : memref<1x8x16x128xf32, #tpu.memory_space<vmem>>, vector<1x8x16x128xf32>,
    return
  }
  func.func @transform_0(%arg0: i32, %arg1: i32) -> (i32, i32, i32, i32, i32) {
    %c0_i32 = arith.constant 0 : i32
    %c0_i32_0 = arith.constant 0 : i32
    %c0_i32_1 = arith.constant 0 : i32
    %c0_i32_2 = arith.constant 0 : i32
    return %arg0, %arg1, %c0_i32, %c0_i32_0, %c0_i32_1 : i32, i32, i32, i32, i32
  }
  func.func @transform_1(%arg0: i32, %arg1: i32) -> (i32, i32, i32) {
    %c0_i32 = arith.constant 0 : i32
    %c0_i32_0 = arith.constant 0 : i32
    %c0_i32_1 = arith.constant 0 : i32
    %c0_i32_2 = arith.constant 0 : i32
    return %c0_i32, %c0_i32_0, %c0_i32_1 : i32, i32, i32
  }
  func.func @transform_2(%arg0: i32, %arg1: i32) -> (i32, i32) {
    %c0_i32 = arith.constant 0 : i32
    %c0_i32_0 = arith.constant 0 : i32
    %c0_i32_1 = arith.constant 0 : i32
    return %c0_i32, %c0_i32_0 : i32, i32
  }
  func.func @transform_3(%arg0: i32, %arg1: i32) -> (i32, i32) {
    %c0_i32 = arith.constant 0 : i32
    %c0_i32_0 = arith.constant 0 : i32
    %c0_i32_1 = arith.constant 0 : i32
    return %c0_i32, %c0_i32_0 : i32, i32
  }
  func.func @transform_4(%arg0: i32, %arg1: i32) -> (i32, i32, i32, i32) {
    %c0_i32 = arith.constant 0 : i32
    %c0_i32_0 = arith.constant 0 : i32
    %c0_i32_1 = arith.constant 0 : i32
    return %arg0, %arg1, %c0_i32, %c0_i32_0 : i32, i32, i32, i32
  }
}

</mosaic_0001>

<llo_original>
// kernel: tpu_custom_call.1
$region0: #{tpu_custom_call.1}
  #allocation0 [shape = 'u32[]', space=smem, size = 0x4, offset = 0x4, fixed_abs, tag = 'smem constant byte address 0x4 - core index']
  #allocation1 [shape = 'u32[72,128]{1,0:T(1,128)}', space=vmem, size = 0x9000, scoped, tag = 'internal scratch']
  #allocation2 [shape = 'f32[128,128]{1,0:T(8,128)}', space=vmem, size = 0x10000, scoped, tag = 'scratch operand']
  %s0 = inlined_call_operand.vmem [shape: f32[2,2,10,16,4], index: 0, kind: input, shape index: {}]
  %s1 = inlined_call_operand.vmem [shape: bf16[9,4,128], index: 1, kind: input, shape index: {}]
  %s2 = inlined_call_operand.vmem [shape: f32[1,128], index: 2, kind: input, shape index: {}]
  %s3 = inlined_call_operand.vmem [shape: f32[1,128], index: 3, kind: input, shape index: {}]
  %s4 = inlined_call_operand.hbm [shape: f32[2,16,16,128], index: 4, kind: output, shape index: {}]
  %s5 = sld [smem:[#allocation0]]
  $region49: #{tpu_custom_call.1} parent=0
    _
  %s7 = ssub.s32 1, %s5
  %s8 = scalar_select 0, %s7, %s5
  $region1: #{tpu_custom_call.1} parent=0
    #allocation3 [shape = 'u8[131072]{0}', space=vmem, size = 0x20000, scoped, tag = 'output window, operand 0']
    #allocation4 [shape = 's32[2]{0}', space=sflag, size = 0x8, scoped, tag = 'scoped memory for tpu_custom_call.1']
    %9 = vsyncpa [#allocation4], 0
    %s10 = scalar_lea.sflag [#allocation4], 1
    %11 = vsyncpa %s10, 0
    loop: start=0, step=1, limit=6
    $region2: #{tpu_custom_call.1} parent=1 // loop_pre_header
      _
    $region3: #{tpu_custom_call.1} parent=1 // loop_header
      %s13 = sphi 0, %s17
      %p14 = scmp.ge.s32.totalorder %s13, 6
      %s20 = sphi 0, %s32
      %s21 = sphi 0, %s28
      %s22 = sphi 0, %s20
      %s23 = sphi 0, %s21
      %s24 = sphi 0, %s22
      %s25 = sphi 0, %s23
      %s37 = sphi 0, %s39
      %s40 = sphi 0, %s37
      %s41 = sphi 0, %s40
      %s57 = sphi 0, %s41
      %s61 = sphi 0, %s61
      %s63 = sphi 0, %s61
      %s64 = sphi 0, %s63
      %s78 = sphi 0, %s64
      %s82 = sphi 0, %s82
      %s84 = sphi 0, %s82
      %s85 = sphi 0, %s84
      %s99 = sphi 0, %s85
      %s103 = sphi 0, %s103
      %s105 = sphi 0, %s103
      %s106 = sphi 0, %s105
      %s120 = sphi 0, %s106
      %s128 = sphi 0, %s130
      %s131 = sphi 0, %s128
      %s132 = sphi 0, %s131
      %s148 = sphi 0, %s132
    $region4: #{tpu_custom_call.1} parent=1 // loop_header_branch
      %16 = sbr.rel (%p14) target = $region8
    $region5: #{tpu_custom_call.1} parent=1 // loop_body
      %s18 = ssub.s32 %s13, 1
      %s19 = ssub.s32 %s13, 2
      %s26 = sadd.s32 1, %s21
      %p27 = scmp.ge.s32.totalorder %s26, 2
      %s28 = scalar_select %p27, 0, %s26
      %s29 = sadd.s32 1, %s20
      %s30 = scalar_select %p27, %s29, %s20
      %p31 = scmp.ge.s32.totalorder %s30, 2
      %s32 = scalar_select %p31, 0, %s30
      %s33 = ssub.s32 %s20, %s32
      %s34 = ssub.s32 %s21, %s28
      %s35 = sor.u32 %s33, %s34
      %p36 = scmp.eq.s32.totalorder %s35, 0
      %s38 = sadd.s32 %s37, 1
      %s39 = scalar_select %p36, %s37, %s38
      %p42 = pneg %p36
      %p43 = scmp.eq.s32.totalorder %s13, 3
      %p44 = por %p42, %p43
      %p45 = scmp.ne.s32.totalorder %s37, %s40
      %p46 = scmp.eq.s32.totalorder %s13, 0
      %p47 = por %p45, %p46
      %p48 = scmp.ne.s32.totalorder %s37, %s40
      %p49 = scmp.eq.s32.totalorder %s18, 3
      %p50 = por %p48, %p49
      %p51 = scmp.ne.s32.totalorder %s40, %s41
      %p52 = scmp.eq.s32.totalorder %s18, 0
      %p53 = por %p51, %p52
      %p54 = scmp.ne.s32.totalorder %s40, %s41
      %p55 = scmp.eq.s32.totalorder %s19, 3
      %p56 = por %p54, %p55
      %p58 = scmp.ne.s32.totalorder %s41, %s57
      %p59 = scmp.eq.s32.totalorder %s19, 0
      %p60 = por %p58, %p59
      %s62 = sadd.s32 %s61, 1
      %p65 = scmp.eq.s32.totalorder %s13, 3
      %p66 = scmp.ne.s32.totalorder %s61, %s63
      %p67 = scmp.eq.s32.totalorder %s13, 0
      %p68 = por %p66, %p67
      %p69 = scmp.ne.s32.totalorder %s61, %s63
      %p70 = scmp.eq.s32.totalorder %s18, 3
      %p71 = por %p69, %p70
      %p72 = scmp.ne.s32.totalorder %s63, %s64
      %p73 = scmp.eq.s32.totalorder %s18, 0
      %p74 = por %p72, %p73
      %p75 = scmp.ne.s32.totalorder %s63, %s64
      %p76 = scmp.eq.s32.totalorder %s19, 3
      %p77 = por %p75, %p76
      %p79 = scmp.ne.s32.totalorder %s64, %s78
      %p80 = scmp.eq.s32.totalorder %s19, 0
      %p81 = por %p79, %p80
      %s83 = sadd.s32 %s82, 1
      %p86 = scmp.eq.s32.totalorder %s13, 3
      %p87 = scmp.ne.s32.totalorder %s82, %s84
      %p88 = scmp.eq.s32.totalorder %s13, 0
      %p89 = por %p87, %p88
      %p90 = scmp.ne.s32.totalorder %s82, %s84
      %p91 = scmp.eq.s32.totalorder %s18, 3
      %p92 = por %p90, %p91
      %p93 = scmp.ne.s32.totalorder %s84, %s85
      %p94 = scmp.eq.s32.totalorder %s18, 0
      %p95 = por %p93, %p94
      %p96 = scmp.ne.s32.totalorder %s84, %s85
      %p97 = scmp.eq.s32.totalorder %s19, 3
      %p98 = por %p96, %p97
      %p100 = scmp.ne.s32.totalorder %s85, %s99
      %p101 = scmp.eq.s32.totalorder %s19, 0
      %p102 = por %p100, %p101
      %s104 = sadd.s32 %s103, 1
      %p107 = scmp.eq.s32.totalorder %s13, 3
      %p108 = scmp.ne.s32.totalorder %s103, %s105
      %p109 = scmp.eq.s32.totalorder %s13, 0
      %p110 = por %p108, %p109
      %p111 = scmp.ne.s32.totalorder %s103, %s105
      %p112 = scmp.eq.s32.totalorder %s18, 3
      %p113 = por %p111, %p112
      %p114 = scmp.ne.s32.totalorder %s105, %s106
      %p115 = scmp.eq.s32.totalorder %s18, 0
      %p116 = por %p114, %p115
      %p117 = scmp.ne.s32.totalorder %s105, %s106
      %p118 = scmp.eq.s32.totalorder %s19, 3
      %p119 = por %p117, %p118
      %p121 = scmp.ne.s32.totalorder %s106, %s120
      %p122 = scmp.eq.s32.totalorder %s19, 0
      %p123 = por %p121, %p122
      %s124 = ssub.s32 %s20, %s32
      %s125 = ssub.s32 %s21, %s28
      %s126 = sor.u32 %s124, %s125
      %p127 = scmp.eq.s32.totalorder %s126, 0
      %s129 = sadd.s32 %s128, 1
      %s130 = scalar_select %p127, %s128, %s129
      %p133 = pneg %p127
      %p134 = scmp.eq.s32.totalorder %s13, 3
      %p135 = por %p133, %p134
      %p136 = scmp.ne.s32.totalorder %s128, %s131
      %p137 = scmp.eq.s32.totalorder %s13, 0
      %p138 = por %p136, %p137
      %p139 = scmp.ne.s32.totalorder %s128, %s131
      %p140 = scmp.eq.s32.totalorder %s18, 3
      %p141 = por %p139, %p140
      %p142 = scmp.ne.s32.totalorder %s131, %s132
      %p143 = scmp.eq.s32.totalorder %s18, 0
      %p144 = por %p142, %p143
      %p145 = scmp.ne.s32.totalorder %s131, %s132
      %p146 = scmp.eq.s32.totalorder %s19, 3
      %p147 = por %p145, %p146
      %p149 = scmp.ne.s32.totalorder %s132, %s148
      %p150 = scmp.eq.s32.totalorder %s19, 0
      %p151 = por %p149, %p150
      %p152 = scmp.le.s32.totalorder 1, %s13
      %p153 = scmp.lt.s32.totalorder %s13, 5
      %p154 = pnand %p152, %p153
      %p155 = pneg %p154
      // Predicated region
      $region9: #{tpu_custom_call.1} parent=5 // pred_check
        _
      $region10: #{tpu_custom_call.1} parent=5 // pred_check_branch
        %157 = sbr.rel (%p154) target = $region12
      $region11: #{tpu_custom_call.1} parent=5 // pred_region
        %s158 = ssub.s32 %s13, 1
        // Predicated region
        $region13: #{tpu_custom_call.1} parent=11 // pred_check
          %p159 = pneg %p74
        $region14: #{tpu_custom_call.1} parent=11 // pred_check_branch
          %161 = sbr.rel (%p159) target = $region16
        $region15: #{tpu_custom_call.1} parent=11 // pred_region
          _
        $region16: #{tpu_custom_call.1} parent=11 // pred_fallthru
          _
        // Predicated region
        $region17: #{tpu_custom_call.1} parent=11 // pred_check
          %p162 = pneg %p95
        $region18: #{tpu_custom_call.1} parent=11 // pred_check_branch
          %164 = sbr.rel (%p162) target = $region20
        $region19: #{tpu_custom_call.1} parent=11 // pred_region
          _
        $region20: #{tpu_custom_call.1} parent=11 // pred_fallthru
          _
        // Predicated region
        $region21: #{tpu_custom_call.1} parent=11 // pred_check
          %p165 = pneg %p116
        $region22: #{tpu_custom_call.1} parent=11 // pred_check_branch
          %167 = sbr.rel (%p165) target = $region24
        $region23: #{tpu_custom_call.1} parent=11 // pred_region
          _
        $region24: #{tpu_custom_call.1} parent=11 // pred_fallthru
          _
      $region12: #{tpu_custom_call.1} parent=5 // pred_fallthru
        _
      %p168 = scmp.lt.s32.totalorder %s13, 4
      // Predicated region
      $region25: #{tpu_custom_call.1} parent=5 // pred_check
        %p169 = pneg %p168
      $region26: #{tpu_custom_call.1} parent=5 // pred_check_branch
        %171 = sbr.rel (%p169) target = $region28
      $region27: #{tpu_custom_call.1} parent=5 // pred_region
        // Predicated region
        $region29: #{tpu_custom_call.1} parent=27 // pred_check
          %p172 = pneg %p47
        $region30: #{tpu_custom_call.1} parent=27 // pred_check_branch
          %174 = sbr.rel (%p172) target = $region32
        $region31: #{tpu_custom_call.1} parent=27 // pred_region
          %p175 = scmp.lt.s32.totalorder %s20, 1
          %s176 = scalar_select %p175, %s20, 1
          %p177 = scmp.lt.s32.totalorder %s21, 1
          %s178 = scalar_select %p177, %s21, 1
          %s179 = smul.addr %s178, 20
          %s180 = smul.addr %s176, 40
          %s181 = sadd.s32 %s179, %s180
          %s182 = smul.addr %s181, 8
          %s183 = scalar_lea.vmem %s0, %s182
        $region32: #{tpu_custom_call.1} parent=27 // pred_fallthru
          _
      $region28: #{tpu_custom_call.1} parent=5 // pred_fallthru
        _
      %p184 = scmp.le.s32.totalorder 1, %s13
      %p185 = scmp.lt.s32.totalorder %s13, 5
      %p186 = pnand %p184, %p185
      %p187 = pneg %p186
      // Predicated region
      $region33: #{tpu_custom_call.1} parent=5 // pred_check
        _
      $region34: #{tpu_custom_call.1} parent=5 // pred_check_branch
        %189 = sbr.rel (%p186) target = $region36
      $region35: #{tpu_custom_call.1} parent=5 // pred_region
        %s190 = ssub.s32 %s13, 1
        %p191 = scmp.lt.s32.totalorder %s22, 1
        %s192 = scalar_select %p191, %s22, 1
        %p193 = scmp.lt.s32.totalorder %s23, 1
        %s194 = scalar_select %p193, %s23, 1
        %s195 = smul.addr %s194, 20
        %s196 = smul.addr %s192, 40
        %s197 = sadd.s32 %s195, %s196
        %s198 = smul.addr %s197, 8
        %s199 = scalar_lea.vmem %s0, %s198
        %p200 = pneg %p53
        %p201 = pneg %p50
        %p202 = pneg %p74
        %p203 = pneg %p71
        %p204 = pneg %p95
        %p205 = pneg %p92
        %p206 = pneg %p116
        %p207 = pneg %p113
        %p208 = pneg %p144
        %p209 = pneg %p141
        %s210 = sand.u32 %s131, 1
        %s211 = scalar_lea.sflag [#allocation4], %s210
        %s212 = sand.u32 %s131, 1
        %s213 = smul.addr %s212, 128
        %s214 = scalar_lea.vmem [#allocation3], %s213
        %p215 = scmp.lt.s32.totalorder %s22, 1
        %s216 = scalar_select %p215, %s22, 1
        %p217 = scmp.lt.s32.totalorder %s23, 1
        %s218 = scalar_select %p217, %s23, 1
        %s219 = smul.addr %s218, 20
        %s220 = smul.addr %s216, 40
        %s221 = sadd.s32 %s219, %s220
        %s222 = smul.addr %s221, 8
        %s223 = scalar_lea.vmem %s0, %s222
        %s224 = smul.u32 8, %s23
        %v226 = vld [vmem:[%s223] sm:$0xff]
        %v227 = vld [vmem:[%s223 + $0x8] sm:$0xff]
        %v228 = vld [vmem:[%s223 + $0x10] sm:$0xff]
        %v229 = vld [vmem:[%s223 + $0x18] sm:$0xff]
        %v230 = vld [vmem:[%s223 + $0x20] sm:$0xff]
        %v231 = vld [vmem:[%s223 + $0x28] sm:$0xff]
        %v232 = vld [vmem:[%s223 + $0x30] sm:$0xff]
        %v233 = vld [vmem:[%s223 + $0x38] sm:$0xff]
        %v234 = vld [vmem:[%s223 + $0x40] sm:$0xff]
        %v235 = vld [vmem:[%s223 + $0x48] sm:$0xff]
        %v236 = vld [vmem:[%s223 + $0x50] sm:$0xff]
        %v237 = vld [vmem:[%s223 + $0x58] sm:$0xff]
        %v238 = vld [vmem:[%s223 + $0x60] sm:$0xff]
        %v239 = vld [vmem:[%s223 + $0x68] sm:$0xff]
        %v240 = vld [vmem:[%s223 + $0x70] sm:$0xff]
        %v241 = vld [vmem:[%s223 + $0x78] sm:$0xff]
        %v242 = vld [vmem:[%s223 + $0x80] sm:$0xff]
        %v243 = vld [vmem:[%s223 + $0x88] sm:$0xff]
        %v244 = vld [vmem:[%s223 + $0x90] sm:$0xff]
        %v245 = vld [vmem:[%s223 + $0x98] sm:$0xff]
        %v246 = vlaneseq
        %v247 = vshrl.u32 %v246, 7
        %v248 = vadd.s32 %v247, 8
        %vm249 = vcmp.eq.s32.totalorder %v247, 0
        %vm250 = vcmp.eq.s32.totalorder %v248, 0
        %v251 = vrot.slane %v226, 7
        %v252 = vrot.slane %v227, 7
        %v253 = vrot.slane %v228, 7
        %v254 = vrot.slane %v229, 7
        %v255 = vrot.slane %v230, 7
        %v256 = vrot.slane %v231, 7
        %v257 = vrot.slane %v232, 7
        %v258 = vrot.slane %v233, 7
        %v259 = vrot.slane %v234, 7
        %v260 = vrot.slane %v235, 7
        %v261 = vrot.slane %v236, 7
        %v262 = vrot.slane %v237, 7
        %v263 = vrot.slane %v238, 7
        %v264 = vrot.slane %v239, 7
        %v265 = vrot.slane %v240, 7
        %v266 = vrot.slane %v241, 7
        %v267 = vrot.slane %v242, 7
        %v268 = vrot.slane %v243, 7
        %v269 = vrot.slane %v244, 7
        %v270 = vrot.slane %v245, 7
        %vm271 = vcmp.lt.s32.totalorder %v247, 1
        %v272 = vsel %vm271, %v269, %v270
        %v273 = vsel %vm271, %v268, %v269
        %v274 = vsel %vm271, %v267, %v268
        %v275 = vsel %vm271, %v266, %v267
        %v276 = vsel %vm271, %v265, %v266
        %v277 = vsel %vm271, %v264, %v265
        %v278 = vsel %vm271, %v263, %v264
        %v279 = vsel %vm271, %v262, %v263
        %v280 = vsel %vm271, %v261, %v262
        %v281 = vsel %vm271, %v260, %v261
        %v282 = vsel %vm271, %v259, %v260
        %v283 = vsel %vm271, %v258, %v259
        %v284 = vsel %vm271, %v257, %v258
        %v285 = vsel %vm271, %v256, %v257
        %v286 = vsel %vm271, %v255, %v256
        %v287 = vsel %vm271, %v254, %v255
        %v288 = vsel %vm271, %v253, %v254
        %v289 = vsel %vm271, %v252, %v253
        %v290 = vsel %vm271, %v251, %v252
        %v291 = vsel %vm271, %v270, %v251
        %v292 = vsel %vm249, 1, 0
        %v293 = vsel %vm250, 1, 0
        %vm294 = vcmp.eq.s32.totalorder %v292, 1
        %vm295 = vcmp.eq.s32.totalorder %v293, 1
        %v296 = vsel %vm294, 0.0, %v291
        %v297 = vsel %vm295, 0.0, %v290
        %v298 = vsel %vm294, 0.0, %v289
        %v299 = vsel %vm295, 0.0, %v288
        %v300 = vsel %vm294, 0.0, %v287
        %v301 = vsel %vm295, 0.0, %v286
        %v302 = vsel %vm294, 0.0, %v285
        %v303 = vsel %vm295, 0.0, %v284
        %v304 = vsel %vm294, 0.0, %v283
        %v305 = vsel %vm295, 0.0, %v282
        %v306 = vsel %vm294, 0.0, %v281
        %v307 = vsel %vm295, 0.0, %v280
        %v308 = vsel %vm294, 0.0, %v279
        %v309 = vsel %vm295, 0.0, %v278
        %v310 = vsel %vm294, 0.0, %v277
        %v311 = vsel %vm295, 0.0, %v276
        %v312 = vsel %vm294, 0.0, %v275
        %v313 = vsel %vm295, 0.0, %v274
        %v314 = vsel %vm294, 0.0, %v273
        %v315 = vsel %vm295, 0.0, %v272
        %vm316 = vcmp.eq.s32.totalorder %v247, 15
        %vm317 = vcmp.eq.s32.totalorder %v248, 15
        %v318 = vrot.slane %v226, 1
        %v319 = vrot.slane %v227, 1
        %v320 = vrot.slane %v228, 1
        %v321 = vrot.slane %v229, 1
        %v322 = vrot.slane %v230, 1
        %v323 = vrot.slane %v231, 1
        %v324 = vrot.slane %v232, 1
        %v325 = vrot.slane %v233, 1
        %v326 = vrot.slane %v234, 1
        %v327 = vrot.slane %v235, 1
        %v328 = vrot.slane %v236, 1
        %v329 = vrot.slane %v237, 1
        %v330 = vrot.slane %v238, 1
        %v331 = vrot.slane %v239, 1
        %v332 = vrot.slane %v240, 1
        %v333 = vrot.slane %v241, 1
        %v334 = vrot.slane %v242, 1
        %v335 = vrot.slane %v243, 1
        %v336 = vrot.slane %v244, 1
        %v337 = vrot.slane %v245, 1
        %vm338 = vcmp.lt.s32.totalorder %v247, 7
        %v339 = vsel %vm338, %v336, %v337
        %v340 = vsel %vm338, %v335, %v336
        %v341 = vsel %vm338, %v334, %v335
        %v342 = vsel %vm338, %v333, %v334
        %v343 = vsel %vm338, %v332, %v333
        %v344 = vsel %vm338, %v331, %v332
        %v345 = vsel %vm338, %v330, %v331
        %v346 = vsel %vm338, %v329, %v330
        %v347 = vsel %vm338, %v328, %v329
        %v348 = vsel %vm338, %v327, %v328
        %v349 = vsel %vm338, %v326, %v327
        %v350 = vsel %vm338, %v325, %v326
        %v351 = vsel %vm338, %v324, %v325
        %v352 = vsel %vm338, %v323, %v324
        %v353 = vsel %vm338, %v322, %v323
        %v354 = vsel %vm338, %v321, %v322
        %v355 = vsel %vm338, %v320, %v321
        %v356 = vsel %vm338, %v319, %v320
        %v357 = vsel %vm338, %v318, %v319
        %v358 = vsel %vm338, %v337, %v318
        %v359 = vsel %vm316, 1, 0
        %v360 = vsel %vm317, 1, 0
        %vm361 = vcmp.eq.s32.totalorder %v359, 1
        %vm362 = vcmp.eq.s32.totalorder %v360, 1
        %v363 = vsel %vm361, 0.0, %v357
        %v364 = vsel %vm362, 0.0, %v356
        %v365 = vsel %vm361, 0.0, %v355
        %v366 = vsel %vm362, 0.0, %v354
        %v367 = vsel %vm361, 0.0, %v353
        %v368 = vsel %vm362, 0.0, %v352
        %v369 = vsel %vm361, 0.0, %v351
        %v370 = vsel %vm362, 0.0, %v350
        %v371 = vsel %vm361, 0.0, %v349
        %v372 = vsel %vm362, 0.0, %v348
        %v373 = vsel %vm361, 0.0, %v347
        %v374 = vsel %vm362, 0.0, %v346
        %v375 = vsel %vm361, 0.0, %v345
        %v376 = vsel %vm362, 0.0, %v344
        %v377 = vsel %vm361, 0.0, %v343
        %v378 = vsel %vm362, 0.0, %v342
        %v379 = vsel %vm361, 0.0, %v341
        %v380 = vsel %vm362, 0.0, %v340
        %v381 = vsel %vm361, 0.0, %v339
        %v382 = vsel %vm362, 0.0, %v358
        %v383 = vpack.c.bf16 %v296, %v296
        %v384 = vpack.c.bf16 %v297, %v297
        %v385 = vpack.c.bf16 %v298, %v298
        %v386 = vpack.c.bf16 %v299, %v299
        %v387 = vpack.c.bf16 %v300, %v300
        %v388 = vpack.c.bf16 %v301, %v301
        %v389 = vpack.c.bf16 %v302, %v302
        %v390 = vpack.c.bf16 %v303, %v303
        %v391 = vpack.c.bf16 %v304, %v304
        %v392 = vpack.c.bf16 %v305, %v305
        %v393 = vpack.c.bf16 %v306, %v306
        %v394 = vpack.c.bf16 %v307, %v307
        %v395 = vpack.c.bf16 %v308, %v308
        %v396 = vpack.c.bf16 %v309, %v309
        %v397 = vpack.c.bf16 %v310, %v310
        %v398 = vpack.c.bf16 %v311, %v311
        %v399 = vpack.c.bf16 %v312, %v312
        %v400 = vpack.c.bf16 %v313, %v313
        %v401 = vpack.c.bf16 %v314, %v314
        %v402 = vpack.c.bf16 %v315, %v315
        %v403 = vpack.c.bf16 %v226, %v226
        %v404 = vpack.c.bf16 %v227, %v227
        %v405 = vpack.c.bf16 %v228, %v228
        %v406 = vpack.c.bf16 %v229, %v229
        %v407 = vpack.c.bf16 %v230, %v230
        %v408 = vpack.c.bf16 %v231, %v231
        %v409 = vpack.c.bf16 %v232, %v232
        %v410 = vpack.c.bf16 %v233, %v233
        %v411 = vpack.c.bf16 %v234, %v234
        %v412 = vpack.c.bf16 %v235, %v235
        %v413 = vpack.c.bf16 %v236, %v236
        %v414 = vpack.c.bf16 %v237, %v237
        %v415 = vpack.c.bf16 %v238, %v238
        %v416 = vpack.c.bf16 %v239, %v239
        %v417 = vpack.c.bf16 %v240, %v240
        %v418 = vpack.c.bf16 %v241, %v241
        %v419 = vpack.c.bf16 %v242, %v242
        %v420 = vpack.c.bf16 %v243, %v243
        %v421 = vpack.c.bf16 %v244, %v244
        %v422 = vpack.c.bf16 %v245, %v245
        %v423 = vpack.c.bf16 %v363, %v363
        %v424 = vpack.c.bf16 %v364, %v364
        %v425 = vpack.c.bf16 %v365, %v365
        %v426 = vpack.c.bf16 %v366, %v366
        %v427 = vpack.c.bf16 %v367, %v367
        %v428 = vpack.c.bf16 %v368, %v368
        %v429 = vpack.c.bf16 %v369, %v369
        %v430 = vpack.c.bf16 %v370, %v370
        %v431 = vpack.c.bf16 %v371, %v371
        %v432 = vpack.c.bf16 %v372, %v372
        %v433 = vpack.c.bf16 %v373, %v373
        %v434 = vpack.c.bf16 %v374, %v374
        %v435 = vpack.c.bf16 %v375, %v375
        %v436 = vpack.c.bf16 %v376, %v376
        %v437 = vpack.c.bf16 %v377, %v377
        %v438 = vpack.c.bf16 %v378, %v378
        %v439 = vpack.c.bf16 %v379, %v379
        %v440 = vpack.c.bf16 %v380, %v380
        %v441 = vpack.c.bf16 %v381, %v381
        %v442 = vpack.c.bf16 %v382, %v382
        %443 = vst [vmem:[#allocation2] sm:$0xff] 0.0
        %444 = vst [vmem:[#allocation2 + $0x8] sm:$0xff] 0.0
        %445 = vst [vmem:[#allocation2 + $0x10] sm:$0xff] 0.0
        %446 = vst [vmem:[#allocation2 + $0x18] sm:$0xff] 0.0
        %447 = vst [vmem:[#allocation2 + $0x20] sm:$0xff] 0.0
        %448 = vst [vmem:[#allocation2 + $0x28] sm:$0xff] 0.0
        %449 = vst [vmem:[#allocation2 + $0x30] sm:$0xff] 0.0
        %450 = vst [vmem:[#allocation2 + $0x38] sm:$0xff] 0.0
        %451 = vst [vmem:[#allocation2 + $0x40] sm:$0xff] 0.0
        %452 = vst [vmem:[#allocation2 + $0x48] sm:$0xff] 0.0
        %453 = vst [vmem:[#allocation2 + $0x50] sm:$0xff] 0.0
        %454 = vst [vmem:[#allocation2 + $0x58] sm:$0xff] 0.0
        %455 = vst [vmem:[#allocation2 + $0x60] sm:$0xff] 0.0
        %456 = vst [vmem:[#allocation2 + $0x68] sm:$0xff] 0.0
        %457 = vst [vmem:[#allocation2 + $0x70] sm:$0xff] 0.0
        %458 = vst [vmem:[#allocation2 + $0x78] sm:$0xff] 0.0
        %v459 = vld [vmem:[#allocation2] sm:$0xff]
        %v460 = vld [vmem:[#allocation2 + $0x8] sm:$0xff]
        %v461 = vld [vmem:[#allocation2 + $0x10] sm:$0xff]
        %v462 = vld [vmem:[#allocation2 + $0x18] sm:$0xff]
        %v463 = vld [vmem:[#allocation2 + $0x20] sm:$0xff]
        %v464 = vld [vmem:[#allocation2 + $0x28] sm:$0xff]
        %v465 = vld [vmem:[#allocation2 + $0x30] sm:$0xff]
        %v466 = vld [vmem:[#allocation2 + $0x38] sm:$0xff]
        %v467 = vld [vmem:[#allocation2 + $0x40] sm:$0xff]
        %v468 = vld [vmem:[#allocation2 + $0x48] sm:$0xff]
        %v469 = vld [vmem:[#allocation2 + $0x50] sm:$0xff]
        %v470 = vld [vmem:[#allocation2 + $0x58] sm:$0xff]
        %v471 = vld [vmem:[#allocation2 + $0x60] sm:$0xff]
        %v472 = vld [vmem:[#allocation2 + $0x68] sm:$0xff]
        %v473 = vld [vmem:[#allocation2 + $0x70] sm:$0xff]
        %v474 = vld [vmem:[#allocation2 + $0x78] sm:$0xff]
        %v475 = vld [vmem:[%s1] sm:$0x3]
        %v492 = vunpack.c.l.b16 %v383
        %v493 = vunpack.c.l.b16 %v384
        %v494 = vunpack.c.l.b16 %v385
        %v495 = vunpack.c.l.b16 %v386
        %v496 = vunpack.c.l.b16 %v387
        %v497 = vunpack.c.l.b16 %v388
        %v498 = vunpack.c.l.b16 %v389
        %v499 = vunpack.c.l.b16 %v390
        %v500 = vunpack.c.l.b16 %v391
        %v501 = vunpack.c.l.b16 %v392
        %v502 = vunpack.c.l.b16 %v393
        %v503 = vunpack.c.l.b16 %v394
        %v504 = vunpack.c.l.b16 %v395
        %v505 = vunpack.c.l.b16 %v396
        %v506 = vunpack.c.l.b16 %v397
        %v507 = vunpack.c.l.b16 %v398
        %v508 = vpack.c.b16 %v493, %v492
        %v509 = vpack.c.b16 %v495, %v494
        %v510 = vpack.c.b16 %v497, %v496
        %v511 = vpack.c.b16 %v499, %v498
        %v512 = vpack.c.b16 %v501, %v500
        %v513 = vpack.c.b16 %v503, %v502
        %v514 = vpack.c.b16 %v505, %v504
        %v515 = vpack.c.b16 %v507, %v506
        %vm516 = vcmask 31744
        %v518 = vsel %vm516, %v508, 0
        %v521 = vsel %vm516, %v509, 0
        %v524 = vsel %vm516, %v510, 0
        %v527 = vsel %vm516, %v511, 0
        %v530 = vsel %vm516, %v512, 0
        %v533 = vsel %vm516, %v513, 0
        %v536 = vsel %vm516, %v514, 0
        %v539 = vsel %vm516, %v515, 0
        %vm541 = vcmask 1041408
        %v543 = vsel %vm541, %v475, 0
        %545 = vmatpush.bf16.msra.mxu0 0
        %546 = vmatpush.bf16.msra.mxu0 0
        %547 = vmatpush.bf16.msra.mxu0 0
        %548 = vmatpush.bf16.msra.mxu0 0
        %549 = vmatpush.bf16.msra.mxu0 0
        %550 = vmatpush.bf16.msra.mxu0 0
        %551 = vmatpush.bf16.msra.mxu0 0
        %552 = vmatpush.bf16.msra.mxu0 %v543
        %553 = vmatmul.bf16.gmra.mxu0 %v518
        %v554 = vpop.f32.mrf.mxu0
        %v555 = vadd.f32 0.0, %v554
        %v556 = vpop.f32.mrf.mxu0
        %v557 = vadd.f32 0.0, %v556
        %558 = vmatmul.bf16.gmra.mxu0 %v521
        %v559 = vpop.f32.mrf.mxu0
        %v560 = vadd.f32 0.0, %v559
        %v561 = vpop.f32.mrf.mxu0
        %v562 = vadd.f32 0.0, %v561
        %563 = vmatmul.bf16.gmra.mxu0 %v524
        %v564 = vpop.f32.mrf.mxu0
        %v565 = vadd.f32 0.0, %v564
        %v566 = vpop.f32.mrf.mxu0
        %v567 = vadd.f32 0.0, %v566
        %568 = vmatmul.bf16.gmra.mxu0 %v527
        %v569 = vpop.f32.mrf.mxu0
        %v570 = vadd.f32 0.0, %v569
        %v571 = vpop.f32.mrf.mxu0
        %v572 = vadd.f32 0.0, %v571
        %573 = vmatmul.bf16.gmra.mxu0 %v530
        %v574 = vpop.f32.mrf.mxu0
        %v575 = vadd.f32 0.0, %v574
        %v576 = vpop.f32.mrf.mxu0
        %v577 = vadd.f32 0.0, %v576
        %578 = vmatmul.bf16.gmra.mxu0 %v533
        %v579 = vpop.f32.mrf.mxu0
        %v580 = vadd.f32 0.0, %v579
        %v581 = vpop.f32.mrf.mxu0
        %v582 = vadd.f32 0.0, %v581
        %583 = vmatmul.bf16.gmra.mxu0 %v536
        %v584 = vpop.f32.mrf.mxu0
        %v585 = vadd.f32 0.0, %v584
        %v586 = vpop.f32.mrf.mxu0
        %v587 = vadd.f32 0.0, %v586
        %588 = vmatmul.bf16.gmra.mxu0 %v539
        %v589 = vpop.f32.mrf.mxu0
        %v590 = vadd.f32 0.0, %v589
        %v591 = vpop.f32.mrf.mxu0
        %v592 = vadd.f32 0.0, %v591
        %593 = vdwg.mxu0
        %v594 = vadd.f32 %v459, %v555
        %v595 = vadd.f32 %v460, %v557
        %v596 = vadd.f32 %v461, %v560
        %v597 = vadd.f32 %v462, %v562
        %v598 = vadd.f32 %v463, %v565
        %v599 = vadd.f32 %v464, %v567
        %v600 = vadd.f32 %v465, %v570
        %v601 = vadd.f32 %v466, %v572
        %v602 = vadd.f32 %v467, %v575
        %v603 = vadd.f32 %v468, %v577
        %v604 = vadd.f32 %v469, %v580
        %v605 = vadd.f32 %v470, %v582
        %v606 = vadd.f32 %v471, %v585
        %v607 = vadd.f32 %v472, %v587
        %v608 = vadd.f32 %v473, %v590
        %v609 = vadd.f32 %v474, %v592
        %610 = vst [vmem:[#allocation2] sm:$0xff] %v594
        %611 = vst [vmem:[#allocation2 + $0x8] sm:$0xff] %v595
        %612 = vst [vmem:[#allocation2 + $0x10] sm:$0xff] %v596
        %613 = vst [vmem:[#allocation2 + $0x18] sm:$0xff] %v597
        %614 = vst [vmem:[#allocation2 + $0x20] sm:$0xff] %v598
        %615 = vst [vmem:[#allocation2 + $0x28] sm:$0xff] %v599
        %616 = vst [vmem:[#allocation2 + $0x30] sm:$0xff] %v600
        %617 = vst [vmem:[#allocation2 + $0x38] sm:$0xff] %v601
        %618 = vst [vmem:[#allocation2 + $0x40] sm:$0xff] %v602
        %619 = vst [vmem:[#allocation2 + $0x48] sm:$0xff] %v603
        %620 = vst [vmem:[#allocation2 + $0x50] sm:$0xff] %v604
        %621 = vst [vmem:[#allocation2 + $0x58] sm:$0xff] %v605
        %622 = vst [vmem:[#allocation2 + $0x60] sm:$0xff] %v606
        %623 = vst [vmem:[#allocation2 + $0x68] sm:$0xff] %v607
        %624 = vst [vmem:[#allocation2 + $0x70] sm:$0xff] %v608
        %625 = vst [vmem:[#allocation2 + $0x78] sm:$0xff] %v609
        %v626 = vld [vmem:[#allocation2] sm:$0xff]
        %v627 = vld [vmem:[#allocation2 + $0x8] sm:$0xff]
        %v628 = vld [vmem:[#allocation2 + $0x10] sm:$0xff]
        %v629 = vld [vmem:[#allocation2 + $0x18] sm:$0xff]
        %v630 = vld [vmem:[#allocation2 + $0x20] sm:$0xff]
        %v631 = vld [vmem:[#allocation2 + $0x28] sm:$0xff]
        %v632 = vld [vmem:[#allocation2 + $0x30] sm:$0xff]
        %v633 = vld [vmem:[#allocation2 + $0x38] sm:$0xff]
        %v634 = vld [vmem:[#allocation2 + $0x40] sm:$0xff]
        %v635 = vld [vmem:[#allocation2 + $0x48] sm:$0xff]
        %v636 = vld [vmem:[#allocation2 + $0x50] sm:$0xff]
        %v637 = vld [vmem:[#allocation2 + $0x58] sm:$0xff]
        %v638 = vld [vmem:[#allocation2 + $0x60] sm:$0xff]
        %v639 = vld [vmem:[#allocation2 + $0x68] sm:$0xff]
        %v640 = vld [vmem:[#allocation2 + $0x70] sm:$0xff]
        %v641 = vld [vmem:[#allocation2 + $0x78] sm:$0xff]
        %s642 = scalar_lea.vmem %s1, 6
        %v643 = vld [vmem:[%s642] sm:$0x3]
        %v646 = vunpack.c.l.b16 %v399
        %v647 = vunpack.c.l.b16 %v400
        %v648 = vpack.c.b16 %v647, %v646
        %v650 = vsel %vm516, %v648, 0
        %v653 = vsel %vm541, %v643, 0
        %655 = vmatpush.bf16.msra.mxu0 0
        %656 = vmatpush.bf16.msra.mxu0 0
        %657 = vmatpush.bf16.msra.mxu0 0
        %658 = vmatpush.bf16.msra.mxu0 0
        %659 = vmatpush.bf16.msra.mxu0 0
        %660 = vmatpush.bf16.msra.mxu0 0
        %661 = vmatpush.bf16.msra.mxu0 0
        %662 = vmatpush.bf16.msra.mxu0 %v653
        %663 = vmatmul.bf16.gmra.mxu0 %v521
        %v664 = vpop.f32.mrf.mxu0
        %v665 = vadd.f32 0.0, %v664
        %v666 = vpop.f32.mrf.mxu0
        %v667 = vadd.f32 0.0, %v666
        %668 = vmatmul.bf16.gmra.mxu0 %v524
        %v669 = vpop.f32.mrf.mxu0
        %v670 = vadd.f32 0.0, %v669
        %v671 = vpop.f32.mrf.mxu0
        %v672 = vadd.f32 0.0, %v671
        %673 = vmatmul.bf16.gmra.mxu0 %v527
        %v674 = vpop.f32.mrf.mxu0
        %v675 = vadd.f32 0.0, %v674
        %v676 = vpop.f32.mrf.mxu0
        %v677 = vadd.f32 0.0, %v676
        %678 = vmatmul.bf16.gmra.mxu0 %v530
        %v679 = vpop.f32.mrf.mxu0
        %v680 = vadd.f32 0.0, %v679
        %v681 = vpop.f32.mrf.mxu0
        %v682 = vadd.f32 0.0, %v681
        %683 = vmatmul.bf16.gmra.mxu0 %v533
        %v684 = vpop.f32.mrf.mxu0
        %v685 = vadd.f32 0.0, %v684
        %v686 = vpop.f32.mrf.mxu0
        %v687 = vadd.f32 0.0, %v686
        %688 = vmatmul.bf16.gmra.mxu0 %v536
        %v689 = vpop.f32.mrf.mxu0
        %v690 = vadd.f32 0.0, %v689
        %v691 = vpop.f32.mrf.mxu0
        %v692 = vadd.f32 0.0, %v691
        %693 = vmatmul.bf16.gmra.mxu0 %v539
        %v694 = vpop.f32.mrf.mxu0
        %v695 = vadd.f32 0.0, %v694
        %v696 = vpop.f32.mrf.mxu0
        %v697 = vadd.f32 0.0, %v696
        %698 = vmatmul.bf16.gmra.mxu0 %v650
        %v699 = vpop.f32.mrf.mxu0
        %v700 = vadd.f32 0.0, %v699
        %v701 = vpop.f32.mrf.mxu0
        %v702 = vadd.f32 0.0, %v701
        %703 = vdwg.mxu0
        %v704 = vadd.f32 %v626, %v665
        %v705 = vadd.f32 %v627, %v667
        %v706 = vadd.f32 %v628, %v670
        %v707 = vadd.f32 %v629, %v672
        %v708 = vadd.f32 %v630, %v675
        %v709 = vadd.f32 %v631, %v677
        %v710 = vadd.f32 %v632, %v680
        %v711 = vadd.f32 %v633, %v682
        %v712 = vadd.f32 %v634, %v685
        %v713 = vadd.f32 %v635, %v687
        %v714 = vadd.f32 %v636, %v690
        %v715 = vadd.f32 %v637, %v692
        %v716 = vadd.f32 %v638, %v695
        %v717 = vadd.f32 %v639, %v697
        %v718 = vadd.f32 %v640, %v700
        %v719 = vadd.f32 %v641, %v702
        %720 = vst [vmem:[#allocation2] sm:$0xff] %v704
        %721 = vst [vmem:[#allocation2 + $0x8] sm:$0xff] %v705
        %722 = vst [vmem:[#allocation2 + $0x10] sm:$0xff] %v706
        %723 = vst [vmem:[#allocation2 + $0x18] sm:$0xff] %v707
        %724 = vst [vmem:[#allocation2 + $0x20] sm:$0xff] %v708
        %725 = vst [vmem:[#allocation2 + $0x28] sm:$0xff] %v709
        %726 = vst [vmem:[#allocation2 + $0x30] sm:$0xff] %v710
        %727 = vst [vmem:[#allocation2 + $0x38] sm:$0xff] %v711
        %728 = vst [vmem:[#allocation2 + $0x40] sm:$0xff] %v712
        %729 = vst [vmem:[#allocation2 + $0x48] sm:$0xff] %v713
        %730 = vst [vmem:[#allocation2 + $0x50] sm:$0xff] %v714
        %731 = vst [vmem:[#allocation2 + $0x58] sm:$0xff] %v715
        %732 = vst [vmem:[#allocation2 + $0x60] sm:$0xff] %v716
        %733 = vst [vmem:[#allocation2 + $0x68] sm:$0xff] %v717
        %734 = vst [vmem:[#allocation2 + $0x70] sm:$0xff] %v718
        %735 = vst [vmem:[#allocation2 + $0x78] sm:$0xff] %v719
        %v736 = vld [vmem:[#allocation2] sm:$0xff]
        %v737 = vld [vmem:[#allocation2 + $0x8] sm:$0xff]
        %v738 = vld [vmem:[#allocation2 + $0x10] sm:$0xff]
        %v739 = vld [vmem:[#allocation2 + $0x18] sm:$0xff]
        %v740 = vld [vmem:[#allocation2 + $0x20] sm:$0xff]
        %v741 = vld [vmem:[#allocation2 + $0x28] sm:$0xff]
        %v742 = vld [vmem:[#allocation2 + $0x30] sm:$0xff]
        %v743 = vld [vmem:[#allocation2 + $0x38] sm:$0xff]
        %v744 = vld [vmem:[#allocation2 + $0x40] sm:$0xff]
        %v745 = vld [vmem:[#allocation2 + $0x48] sm:$0xff]
        %v746 = vld [vmem:[#allocation2 + $0x50] sm:$0xff]
        %v747 = vld [vmem:[#allocation2 + $0x58] sm:$0xff]
        %v748 = vld [vmem:[#allocation2 + $0x60] sm:$0xff]
        %v749 = vld [vmem:[#allocation2 + $0x68] sm:$0xff]
        %v750 = vld [vmem:[#allocation2 + $0x70] sm:$0xff]
        %v751 = vld [vmem:[#allocation2 + $0x78] sm:$0xff]
        %s752 = scalar_lea.vmem %s1, 12
        %v753 = vld [vmem:[%s752] sm:$0x3]
        %v756 = vunpack.c.l.b16 %v401
        %v757 = vunpack.c.l.b16 %v402
        %v758 = vpack.c.b16 %v757, %v756
        %v760 = vsel %vm516, %v758, 0
        %v763 = vsel %vm541, %v753, 0
        %765 = vmatpush.bf16.msra.mxu0 0
        %766 = vmatpush.bf16.msra.mxu0 0
        %767 = vmatpush.bf16.msra.mxu0 0
        %768 = vmatpush.bf16.msra.mxu0 0
        %769 = vmatpush.bf16.msra.mxu0 0
        %770 = vmatpush.bf16.msra.mxu0 0
        %771 = vmatpush.bf16.msra.mxu0 0
        %772 = vmatpush.bf16.msra.mxu0 %v763
        %773 = vmatmul.bf16.gmra.mxu0 %v524
        %v774 = vpop.f32.mrf.mxu0
        %v775 = vadd.f32 0.0, %v774
        %v776 = vpop.f32.mrf.mxu0
        %v777 = vadd.f32 0.0, %v776
        %778 = vmatmul.bf16.gmra.mxu0 %v527
        %v779 = vpop.f32.mrf.mxu0
        %v780 = vadd.f32 0.0, %v779
        %v781 = vpop.f32.mrf.mxu0
        %v782 = vadd.f32 0.0, %v781
        %783 = vmatmul.bf16.gmra.mxu0 %v530
        %v784 = vpop.f32.mrf.mxu0
        %v785 = vadd.f32 0.0, %v784
        %v786 = vpop.f32.mrf.mxu0
        %v787 = vadd.f32 0.0, %v786
        %788 = vmatmul.bf16.gmra.mxu0 %v533
        %v789 = vpop.f32.mrf.mxu0
        %v790 = vadd.f32 0.0, %v789
        %v791 = vpop.f32.mrf.mxu0
        %v792 = vadd.f32 0.0, %v791
        %793 = vmatmul.bf16.gmra.mxu0 %v536
        %v794 = vpop.f32.mrf.mxu0
        %v795 = vadd.f32 0.0, %v794
        %v796 = vpop.f32.mrf.mxu0
        %v797 = vadd.f32 0.0, %v796
        %798 = vmatmul.bf16.gmra.mxu0 %v539
        %v799 = vpop.f32.mrf.mxu0
        %v800 = vadd.f32 0.0, %v799
        %v801 = vpop.f32.mrf.mxu0
        %v802 = vadd.f32 0.0, %v801
        %803 = vmatmul.bf16.gmra.mxu0 %v650
        %v804 = vpop.f32.mrf.mxu0
        %v805 = vadd.f32 0.0, %v804
        %v806 = vpop.f32.mrf.mxu0
        %v807 = vadd.f32 0.0, %v806
        %808 = vmatmul.bf16.gmra.mxu0 %v760
        %v809 = vpop.f32.mrf.mxu0
        %v810 = vadd.f32 0.0, %v809
        %v811 = vpop.f32.mrf.mxu0
        %v812 = vadd.f32 0.0, %v811
        %813 = vdwg.mxu0
        %v814 = vadd.f32 %v736, %v775
        %v815 = vadd.f32 %v737, %v777
        %v816 = vadd.f32 %v738, %v780
        %v817 = vadd.f32 %v739, %v782
        %v818 = vadd.f32 %v740, %v785
        %v819 = vadd.f32 %v741, %v787
        %v820 = vadd.f32 %v742, %v790
        %v821 = vadd.f32 %v743, %v792
        %v822 = vadd.f32 %v744, %v795
        %v823 = vadd.f32 %v745, %v797
        %v824 = vadd.f32 %v746, %v800
        %v825 = vadd.f32 %v747, %v802
        %v826 = vadd.f32 %v748, %v805
        %v827 = vadd.f32 %v749, %v807
        %v828 = vadd.f32 %v750, %v810
        %v829 = vadd.f32 %v751, %v812
        %830 = vst [vmem:[#allocation2] sm:$0xff] %v814
        %831 = vst [vmem:[#allocation2 + $0x8] sm:$0xff] %v815
        %832 = vst [vmem:[#allocation2 + $0x10] sm:$0xff] %v816
        %833 = vst [vmem:[#allocation2 + $0x18] sm:$0xff] %v817
        %834 = vst [vmem:[#allocation2 + $0x20] sm:$0xff] %v818
        %835 = vst [vmem:[#allocation2 + $0x28] sm:$0xff] %v819
        %836 = vst [vmem:[#allocation2 + $0x30] sm:$0xff] %v820
        %837 = vst [vmem:[#allocation2 + $0x38] sm:$0xff] %v821
        %838 = vst [vmem:[#allocation2 + $0x40] sm:$0xff] %v822
        %839 = vst [vmem:[#allocation2 + $0x48] sm:$0xff] %v823
        %840 = vst [vmem:[#allocation2 + $0x50] sm:$0xff] %v824
        %841 = vst [vmem:[#allocation2 + $0x58] sm:$0xff] %v825
        %842 = vst [vmem:[#allocation2 + $0x60] sm:$0xff] %v826
        %843 = vst [vmem:[#allocation2 + $0x68] sm:$0xff] %v827
        %844 = vst [vmem:[#allocation2 + $0x70] sm:$0xff] %v828
        %845 = vst [vmem:[#allocation2 + $0x78] sm:$0xff] %v829
        %v846 = vld [vmem:[#allocation2] sm:$0xff]
        %v847 = vld [vmem:[#allocation2 + $0x8] sm:$0xff]
        %v848 = vld [vmem:[#allocation2 + $0x10] sm:$0xff]
        %v849 = vld [vmem:[#allocation2 + $0x18] sm:$0xff]
        %v850 = vld [vmem:[#allocation2 + $0x20] sm:$0xff]
        %v851 = vld [vmem:[#allocation2 + $0x28] sm:$0xff]
        %v852 = vld [vmem:[#allocation2 + $0x30] sm:$0xff]
        %v853 = vld [vmem:[#allocation2 + $0x38] sm:$0xff]
        %v854 = vld [vmem:[#allocation2 + $0x40] sm:$0xff]
        %v855 = vld [vmem:[#allocation2 + $0x48] sm:$0xff]
        %v856 = vld [vmem:[#allocation2 + $0x50] sm:$0xff]
        %v857 = vld [vmem:[#allocation2 + $0x58] sm:$0xff]
        %v858 = vld [vmem:[#allocation2 + $0x60] sm:$0xff]
        %v859 = vld [vmem:[#allocation2 + $0x68] sm:$0xff]
        %v860 = vld [vmem:[#allocation2 + $0x70] sm:$0xff]
        %v861 = vld [vmem:[#allocation2 + $0x78] sm:$0xff]
        %s862 = scalar_lea.vmem %s1, 2
        %v863 = vld [vmem:[%s862] sm:$0x3]
        %v880 = vunpack.c.l.b16 %v403
        %v881 = vunpack.c.l.b16 %v404
        %v882 = vunpack.c.l.b16 %v405
        %v883 = vunpack.c.l.b16 %v406
        %v884 = vunpack.c.l.b16 %v407
        %v885 = vunpack.c.l.b16 %v408
        %v886 = vunpack.c.l.b16 %v409
        %v887 = vunpack.c.l.b16 %v410
        %v888 = vunpack.c.l.b16 %v411
        %v889 = vunpack.c.l.b16 %v412
        %v890 = vunpack.c.l.b16 %v413
        %v891 = vunpack.c.l.b16 %v414
        %v892 = vunpack.c.l.b16 %v415
        %v893 = vunpack.c.l.b16 %v416
        %v894 = vunpack.c.l.b16 %v417
        %v895 = vunpack.c.l.b16 %v418
        %v896 = vpack.c.b16 %v881, %v880
        %v897 = vpack.c.b16 %v883, %v882
        %v898 = vpack.c.b16 %v885, %v884
        %v899 = vpack.c.b16 %v887, %v886
        %v900 = vpack.c.b16 %v889, %v888
        %v901 = vpack.c.b16 %v891, %v890
        %v902 = vpack.c.b16 %v893, %v892
        %v903 = vpack.c.b16 %v895, %v894
        %v905 = vsel %vm516, %v896, 0
        %v908 = vsel %vm516, %v897, 0
        %v911 = vsel %vm516, %v898, 0
        %v914 = vsel %vm516, %v899, 0
        %v917 = vsel %vm516, %v900, 0
        %v920 = vsel %vm516, %v901, 0
        %v923 = vsel %vm516, %v902, 0
        %v926 = vsel %vm516, %v903, 0
        %v929 = vsel %vm541, %v863, 0
        %931 = vmatpush.bf16.msra.mxu0 0
        %932 = vmatpush.bf16.msra.mxu0 0
        %933 = vmatpush.bf16.msra.mxu0 0
        %934 = vmatpush.bf16.msra.mxu0 0
        %935 = vmatpush.bf16.msra.mxu0 0
        %936 = vmatpush.bf16.msra.mxu0 0
        %937 = vmatpush.bf16.msra.mxu0 0
        %938 = vmatpush.bf16.msra.mxu0 %v929
        %939 = vmatmul.bf16.gmra.mxu0 %v905
        %v940 = vpop.f32.mrf.mxu0
        %v941 = vadd.f32 0.0, %v940
        %v942 = vpop.f32.mrf.mxu0
        %v943 = vadd.f32 0.0, %v942
        %944 = vmatmul.bf16.gmra.mxu0 %v908
        %v945 = vpop.f32.mrf.mxu0
        %v946 = vadd.f32 0.0, %v945
        %v947 = vpop.f32.mrf.mxu0
        %v948 = vadd.f32 0.0, %v947
        %949 = vmatmul.bf16.gmra.mxu0 %v911
        %v950 = vpop.f32.mrf.mxu0
        %v951 = vadd.f32 0.0, %v950
        %v952 = vpop.f32.mrf.mxu0
        %v953 = vadd.f32 0.0, %v952
        %954 = vmatmul.bf16.gmra.mxu0 %v914
        %v955 = vpop.f32.mrf.mxu0
        %v956 = vadd.f32 0.0, %v955
        %v957 = vpop.f32.mrf.mxu0
        %v958 = vadd.f32 0.0, %v957
        %959 = vmatmul.bf16.gmra.mxu0 %v917
        %v960 = vpop.f32.mrf.mxu0
        %v961 = vadd.f32 0.0, %v960
        %v962 = vpop.f32.mrf.mxu0
        %v963 = vadd.f32 0.0, %v962
        %964 = vmatmul.bf16.gmra.mxu0 %v920
        %v965 = vpop.f32.mrf.mxu0
        %v966 = vadd.f32 0.0, %v965
        %v967 = vpop.f32.mrf.mxu0
        %v968 = vadd.f32 0.0, %v967
        %969 = vmatmul.bf16.gmra.mxu0 %v923
        %v970 = vpop.f32.mrf.mxu0
        %v971 = vadd.f32 0.0, %v970
        %v972 = vpop.f32.mrf.mxu0
        %v973 = vadd.f32 0.0, %v972
        %974 = vmatmul.bf16.gmra.mxu0 %v926
        %v975 = vpop.f32.mrf.mxu0
        %v976 = vadd.f32 0.0, %v975
        %v977 = vpop.f32.mrf.mxu0
        %v978 = vadd.f32 0.0, %v977
        %979 = vdwg.mxu0
        %v980 = vadd.f32 %v846, %v941
        %v981 = vadd.f32 %v847, %v943
        %v982 = vadd.f32 %v848, %v946
        %v983 = vadd.f32 %v849, %v948
        %v984 = vadd.f32 %v850, %v951
        %v985 = vadd.f32 %v851, %v953
        %v986 = vadd.f32 %v852, %v956
        %v987 = vadd.f32 %v853, %v958
        %v988 = vadd.f32 %v854, %v961
        %v989 = vadd.f32 %v855, %v963
        %v990 = vadd.f32 %v856, %v966
        %v991 = vadd.f32 %v857, %v968
        %v992 = vadd.f32 %v858, %v971
        %v993 = vadd.f32 %v859, %v973
        %v994 = vadd.f32 %v860, %v976
        %v995 = vadd.f32 %v861, %v978
        %996 = vst [vmem:[#allocation2] sm:$0xff] %v980
        %997 = vst [vmem:[#allocation2 + $0x8] sm:$0xff] %v981
        %998 = vst [vmem:[#allocation2 + $0x10] sm:$0xff] %v982
        %999 = vst [vmem:[#allocation2 + $0x18] sm:$0xff] %v983
        %1000 = vst [vmem:[#allocation2 + $0x20] sm:$0xff] %v984
        %1001 = vst [vmem:[#allocation2 + $0x28] sm:$0xff] %v985
        %1002 = vst [vmem:[#allocation2 + $0x30] sm:$0xff] %v986
        %1003 = vst [vmem:[#allocation2 + $0x38] sm:$0xff] %v987
        %1004 = vst [vmem:[#allocation2 + $0x40] sm:$0xff] %v988
        %1005 = vst [vmem:[#allocation2 + $0x48] sm:$0xff] %v989
        %1006 = vst [vmem:[#allocation2 + $0x50] sm:$0xff] %v990
        %1007 = vst [vmem:[#allocation2 + $0x58] sm:$0xff] %v991
        %1008 = vst [vmem:[#allocation2 + $0x60] sm:$0xff] %v992
        %1009 = vst [vmem:[#allocation2 + $0x68] sm:$0xff] %v993
        %1010 = vst [vmem:[#allocation2 + $0x70] sm:$0xff] %v994
        %1011 = vst [vmem:[#allocation2 + $0x78] sm:$0xff] %v995
        %v1012 = vld [vmem:[#allocation2] sm:$0xff]
        %v1013 = vld [vmem:[#allocation2 + $0x8] sm:$0xff]
        %v1014 = vld [vmem:[#allocation2 + $0x10] sm:$0xff]
        %v1015 = vld [vmem:[#allocation2 + $0x18] sm:$0xff]
        %v1016 = vld [vmem:[#allocation2 + $0x20] sm:$0xff]
        %v1017 = vld [vmem:[#allocation2 + $0x28] sm:$0xff]
        %v1018 = vld [vmem:[#allocation2 + $0x30] sm:$0xff]
        %v1019 = vld [vmem:[#allocation2 + $0x38] sm:$0xff]
        %v1020 = vld [vmem:[#allocation2 + $0x40] sm:$0xff]
        %v1021 = vld [vmem:[#allocation2 + $0x48] sm:$0xff]
        %v1022 = vld [vmem:[#allocation2 + $0x50] sm:$0xff]
        %v1023 = vld [vmem:[#allocation2 + $0x58] sm:$0xff]
        %v1024 = vld [vmem:[#allocation2 + $0x60] sm:$0xff]
        %v1025 = vld [vmem:[#allocation2 + $0x68] sm:$0xff]
        %v1026 = vld [vmem:[#allocation2 + $0x70] sm:$0xff]
        %v1027 = vld [vmem:[#allocation2 + $0x78] sm:$0xff]
        %s1028 = scalar_lea.vmem %s1, 8
        %v1029 = vld [vmem:[%s1028] sm:$0x3]
        %v1032 = vunpack.c.l.b16 %v419
        %v1033 = vunpack.c.l.b16 %v420
        %v1034 = vpack.c.b16 %v1033, %v1032
        %v1036 = vsel %vm516, %v1034, 0
        %v1039 = vsel %vm541, %v1029, 0
        %1041 = vmatpush.bf16.msra.mxu0 0
        %1042 = vmatpush.bf16.msra.mxu0 0
        %1043 = vmatpush.bf16.msra.mxu0 0
        %1044 = vmatpush.bf16.msra.mxu0 0
        %1045 = vmatpush.bf16.msra.mxu0 0
        %1046 = vmatpush.bf16.msra.mxu0 0
        %1047 = vmatpush.bf16.msra.mxu0 0
        %1048 = vmatpush.bf16.msra.mxu0 %v1039
        %1049 = vmatmul.bf16.gmra.mxu0 %v908
        %v1050 = vpop.f32.mrf.mxu0
        %v1051 = vadd.f32 0.0, %v1050
        %v1052 = vpop.f32.mrf.mxu0
        %v1053 = vadd.f32 0.0, %v1052
        %1054 = vmatmul.bf16.gmra.mxu0 %v911
        %v1055 = vpop.f32.mrf.mxu0
        %v1056 = vadd.f32 0.0, %v1055
        %v1057 = vpop.f32.mrf.mxu0
        %v1058 = vadd.f32 0.0, %v1057
        %1059 = vmatmul.bf16.gmra.mxu0 %v914
        %v1060 = vpop.f32.mrf.mxu0
        %v1061 = vadd.f32 0.0, %v1060
        %v1062 = vpop.f32.mrf.mxu0
        %v1063 = vadd.f32 0.0, %v1062
        %1064 = vmatmul.bf16.gmra.mxu0 %v917
        %v1065 = vpop.f32.mrf.mxu0
        %v1066 = vadd.f32 0.0, %v1065
        %v1067 = vpop.f32.mrf.mxu0
        %v1068 = vadd.f32 0.0, %v1067
        %1069 = vmatmul.bf16.gmra.mxu0 %v920
        %v1070 = vpop.f32.mrf.mxu0
        %v1071 = vadd.f32 0.0, %v1070
        %v1072 = vpop.f32.mrf.mxu0
        %v1073 = vadd.f32 0.0, %v1072
        %1074 = vmatmul.bf16.gmra.mxu0 %v923
        %v1075 = vpop.f32.mrf.mxu0
        %v1076 = vadd.f32 0.0, %v1075
        %v1077 = vpop.f32.mrf.mxu0
        %v1078 = vadd.f32 0.0, %v1077
        %1079 = vmatmul.bf16.gmra.mxu0 %v926
        %v1080 = vpop.f32.mrf.mxu0
        %v1081 = vadd.f32 0.0, %v1080
        %v1082 = vpop.f32.mrf.mxu0
        %v1083 = vadd.f32 0.0, %v1082
        %1084 = vmatmul.bf16.gmra.mxu0 %v1036
        %v1085 = vpop.f32.mrf.mxu0
        %v1086 = vadd.f32 0.0, %v1085
        %v1087 = vpop.f32.mrf.mxu0
        %v1088 = vadd.f32 0.0, %v1087
        %1089 = vdwg.mxu0
        %v1090 = vadd.f32 %v1012, %v1051
        %v1091 = vadd.f32 %v1013, %v1053
        %v1092 = vadd.f32 %v1014, %v1056
        %v1093 = vadd.f32 %v1015, %v1058
        %v1094 = vadd.f32 %v1016, %v1061
        %v1095 = vadd.f32 %v1017, %v1063
        %v1096 = vadd.f32 %v1018, %v1066
        %v1097 = vadd.f32 %v1019, %v1068
        %v1098 = vadd.f32 %v1020, %v1071
        %v1099 = vadd.f32 %v1021, %v1073
        %v1100 = vadd.f32 %v1022, %v1076
        %v1101 = vadd.f32 %v1023, %v1078
        %v1102 = vadd.f32 %v1024, %v1081
        %v1103 = vadd.f32 %v1025, %v1083
        %v1104 = vadd.f32 %v1026, %v1086
        %v1105 = vadd.f32 %v1027, %v1088
        %1106 = vst [vmem:[#allocation2] sm:$0xff] %v1090
        %1107 = vst [vmem:[#allocation2 + $0x8] sm:$0xff] %v1091
        %1108 = vst [vmem:[#allocation2 + $0x10] sm:$0xff] %v1092
        %1109 = vst [vmem:[#allocation2 + $0x18] sm:$0xff] %v1093
        %1110 = vst [vmem:[#allocation2 + $0x20] sm:$0xff] %v1094
        %1111 = vst [vmem:[#allocation2 + $0x28] sm:$0xff] %v1095
        %1112 = vst [vmem:[#allocation2 + $0x30] sm:$0xff] %v1096
        %1113 = vst [vmem:[#allocation2 + $0x38] sm:$0xff] %v1097
        %1114 = vst [vmem:[#allocation2 + $0x40] sm:$0xff] %v1098
        %1115 = vst [vmem:[#allocation2 + $0x48] sm:$0xff] %v1099
        %1116 = vst [vmem:[#allocation2 + $0x50] sm:$0xff] %v1100
        %1117 = vst [vmem:[#allocation2 + $0x58] sm:$0xff] %v1101
        %1118 = vst [vmem:[#allocation2 + $0x60] sm:$0xff] %v1102
        %1119 = vst [vmem:[#allocation2 + $0x68] sm:$0xff] %v1103
        %1120 = vst [vmem:[#allocation2 + $0x70] sm:$0xff] %v1104
        %1121 = vst [vmem:[#allocation2 + $0x78] sm:$0xff] %v1105
        %v1122 = vld [vmem:[#allocation2] sm:$0xff]
        %v1123 = vld [vmem:[#allocation2 + $0x8] sm:$0xff]
        %v1124 = vld [vmem:[#allocation2 + $0x10] sm:$0xff]
        %v1125 = vld [vmem:[#allocation2 + $0x18] sm:$0xff]
        %v1126 = vld [vmem:[#allocation2 + $0x20] sm:$0xff]
        %v1127 = vld [vmem:[#allocation2 + $0x28] sm:$0xff]
        %v1128 = vld [vmem:[#allocation2 + $0x30] sm:$0xff]
        %v1129 = vld [vmem:[#allocation2 + $0x38] sm:$0xff]
        %v1130 = vld [vmem:[#allocation2 + $0x40] sm:$0xff]
        %v1131 = vld [vmem:[#allocation2 + $0x48] sm:$0xff]
        %v1132 = vld [vmem:[#allocation2 + $0x50] sm:$0xff]
        %v1133 = vld [vmem:[#allocation2 + $0x58] sm:$0xff]
        %v1134 = vld [vmem:[#allocation2 + $0x60] sm:$0xff]
        %v1135 = vld [vmem:[#allocation2 + $0x68] sm:$0xff]
        %v1136 = vld [vmem:[#allocation2 + $0x70] sm:$0xff]
        %v1137 = vld [vmem:[#allocation2 + $0x78] sm:$0xff]
        %s1138 = scalar_lea.vmem %s1, 14
        %v1139 = vld [vmem:[%s1138] sm:$0x3]
        %v1142 = vunpack.c.l.b16 %v421
        %v1143 = vunpack.c.l.b16 %v422
        %v1144 = vpack.c.b16 %v1143, %v1142
        %v1146 = vsel %vm516, %v1144, 0
        %v1149 = vsel %vm541, %v1139, 0
        %1151 = vmatpush.bf16.msra.mxu0 0
        %1152 = vmatpush.bf16.msra.mxu0 0
        %1153 = vmatpush.bf16.msra.mxu0 0
        %1154 = vmatpush.bf16.msra.mxu0 0
        %1155 = vmatpush.bf16.msra.mxu0 0
        %1156 = vmatpush.bf16.msra.mxu0 0
        %1157 = vmatpush.bf16.msra.mxu0 0
        %1158 = vmatpush.bf16.msra.mxu0 %v1149
        %1159 = vmatmul.bf16.gmra.mxu0 %v911
        %v1160 = vpop.f32.mrf.mxu0
        %v1161 = vadd.f32 0.0, %v1160
        %v1162 = vpop.f32.mrf.mxu0
        %v1163 = vadd.f32 0.0, %v1162
        %1164 = vmatmul.bf16.gmra.mxu0 %v914
        %v1165 = vpop.f32.mrf.mxu0
        %v1166 = vadd.f32 0.0, %v1165
        %v1167 = vpop.f32.mrf.mxu0
        %v1168 = vadd.f32 0.0, %v1167
        %1169 = vmatmul.bf16.gmra.mxu0 %v917
        %v1170 = vpop.f32.mrf.mxu0
        %v1171 = vadd.f32 0.0, %v1170
        %v1172 = vpop.f32.mrf.mxu0
        %v1173 = vadd.f32 0.0, %v1172
        %1174 = vmatmul.bf16.gmra.mxu0 %v920
        %v1175 = vpop.f32.mrf.mxu0
        %v1176 = vadd.f32 0.0, %v1175
        %v1177 = vpop.f32.mrf.mxu0
        %v1178 = vadd.f32 0.0, %v1177
        %1179 = vmatmul.bf16.gmra.mxu0 %v923
        %v1180 = vpop.f32.mrf.mxu0
        %v1181 = vadd.f32 0.0, %v1180
        %v1182 = vpop.f32.mrf.mxu0
        %v1183 = vadd.f32 0.0, %v1182
        %1184 = vmatmul.bf16.gmra.mxu0 %v926
        %v1185 = vpop.f32.mrf.mxu0
        %v1186 = vadd.f32 0.0, %v1185
        %v1187 = vpop.f32.mrf.mxu0
        %v1188 = vadd.f32 0.0, %v1187
        %1189 = vmatmul.bf16.gmra.mxu0 %v1036
        %v1190 = vpop.f32.mrf.mxu0
        %v1191 = vadd.f32 0.0, %v1190
        %v1192 = vpop.f32.mrf.mxu0
        %v1193 = vadd.f32 0.0, %v1192
        %1194 = vmatmul.bf16.gmra.mxu0 %v1146
        %v1195 = vpop.f32.mrf.mxu0
        %v1196 = vadd.f32 0.0, %v1195
        %v1197 = vpop.f32.mrf.mxu0
        %v1198 = vadd.f32 0.0, %v1197
        %1199 = vdwg.mxu0
        %v1200 = vadd.f32 %v1122, %v1161
        %v1201 = vadd.f32 %v1123, %v1163
        %v1202 = vadd.f32 %v1124, %v1166
        %v1203 = vadd.f32 %v1125, %v1168
        %v1204 = vadd.f32 %v1126, %v1171
        %v1205 = vadd.f32 %v1127, %v1173
        %v1206 = vadd.f32 %v1128, %v1176
        %v1207 = vadd.f32 %v1129, %v1178
        %v1208 = vadd.f32 %v1130, %v1181
        %v1209 = vadd.f32 %v1131, %v1183
        %v1210 = vadd.f32 %v1132, %v1186
        %v1211 = vadd.f32 %v1133, %v1188
        %v1212 = vadd.f32 %v1134, %v1191
        %v1213 = vadd.f32 %v1135, %v1193
        %v1214 = vadd.f32 %v1136, %v1196
        %v1215 = vadd.f32 %v1137, %v1198
        %1216 = vst [vmem:[#allocation2] sm:$0xff] %v1200
        %1217 = vst [vmem:[#allocation2 + $0x8] sm:$0xff] %v1201
        %1218 = vst [vmem:[#allocation2 + $0x10] sm:$0xff] %v1202
        %1219 = vst [vmem:[#allocation2 + $0x18] sm:$0xff] %v1203
        %1220 = vst [vmem:[#allocation2 + $0x20] sm:$0xff] %v1204
        %1221 = vst [vmem:[#allocation2 + $0x28] sm:$0xff] %v1205
        %1222 = vst [vmem:[#allocation2 + $0x30] sm:$0xff] %v1206
        %1223 = vst [vmem:[#allocation2 + $0x38] sm:$0xff] %v1207
        %1224 = vst [vmem:[#allocation2 + $0x40] sm:$0xff] %v1208
        %1225 = vst [vmem:[#allocation2 + $0x48] sm:$0xff] %v1209
        %1226 = vst [vmem:[#allocation2 + $0x50] sm:$0xff] %v1210
        %1227 = vst [vmem:[#allocation2 + $0x58] sm:$0xff] %v1211
        %1228 = vst [vmem:[#allocation2 + $0x60] sm:$0xff] %v1212
        %1229 = vst [vmem:[#allocation2 + $0x68] sm:$0xff] %v1213
        %1230 = vst [vmem:[#allocation2 + $0x70] sm:$0xff] %v1214
        %1231 = vst [vmem:[#allocation2 + $0x78] sm:$0xff] %v1215
        %v1232 = vld [vmem:[#allocation2] sm:$0xff]
        %v1233 = vld [vmem:[#allocation2 + $0x8] sm:$0xff]
        %v1234 = vld [vmem:[#allocation2 + $0x10] sm:$0xff]
        %v1235 = vld [vmem:[#allocation2 + $0x18] sm:$0xff]
        %v1236 = vld [vmem:[#allocation2 + $0x20] sm:$0xff]
        %v1237 = vld [vmem:[#allocation2 + $0x28] sm:$0xff]
        %v1238 = vld [vmem:[#allocation2 + $0x30] sm:$0xff]
        %v1239 = vld [vmem:[#allocation2 + $0x38] sm:$0xff]
        %v1240 = vld [vmem:[#allocation2 + $0x40] sm:$0xff]
        %v1241 = vld [vmem:[#allocation2 + $0x48] sm:$0xff]
        %v1242 = vld [vmem:[#allocation2 + $0x50] sm:$0xff]
        %v1243 = vld [vmem:[#allocation2 + $0x58] sm:$0xff]
        %v1244 = vld [vmem:[#allocation2 + $0x60] sm:$0xff]
        %v1245 = vld [vmem:[#allocation2 + $0x68] sm:$0xff]
        %v1246 = vld [vmem:[#allocation2 + $0x70] sm:$0xff]
        %v1247 = vld [vmem:[#allocation2 + $0x78] sm:$0xff]
        %s1248 = scalar_lea.vmem %s1, 4
        %v1249 = vld [vmem:[%s1248] sm:$0x3]
        %v1266 = vunpack.c.l.b16 %v423
        %v1267 = vunpack.c.l.b16 %v424
        %v1268 = vunpack.c.l.b16 %v425
        %v1269 = vunpack.c.l.b16 %v426
        %v1270 = vunpack.c.l.b16 %v427
        %v1271 = vunpack.c.l.b16 %v428
        %v1272 = vunpack.c.l.b16 %v429
        %v1273 = vunpack.c.l.b16 %v430
        %v1274 = vunpack.c.l.b16 %v431
        %v1275 = vunpack.c.l.b16 %v432
        %v1276 = vunpack.c.l.b16 %v433
        %v1277 = vunpack.c.l.b16 %v434
        %v1278 = vunpack.c.l.b16 %v435
        %v1279 = vunpack.c.l.b16 %v436
        %v1280 = vunpack.c.l.b16 %v437
        %v1281 = vunpack.c.l.b16 %v438
        %v1282 = vpack.c.b16 %v1267, %v1266
        %v1283 = vpack.c.b16 %v1269, %v1268
        %v1284 = vpack.c.b16 %v1271, %v1270
        %v1285 = vpack.c.b16 %v1273, %v1272
        %v1286 = vpack.c.b16 %v1275, %v1274
        %v1287 = vpack.c.b16 %v1277, %v1276
        %v1288 = vpack.c.b16 %v1279, %v1278
        %v1289 = vpack.c.b16 %v1281, %v1280
        %v1291 = vsel %vm516, %v1282, 0
        %v1294 = vsel %vm516, %v1283, 0
        %v1297 = vsel %vm516, %v1284, 0
        %v1300 = vsel %vm516, %v1285, 0
        %v1303 = vsel %vm516, %v1286, 0
        %v1306 = vsel %vm516, %v1287, 0
        %v1309 = vsel %vm516, %v1288, 0
        %v1312 = vsel %vm516, %v1289, 0
        %v1315 = vsel %vm541, %v1249, 0
        %1317 = vmatpush.bf16.msra.mxu0 0
        %1318 = vmatpush.bf16.msra.mxu0 0
        %1319 = vmatpush.bf16.msra.mxu0 0
        %1320 = vmatpush.bf16.msra.mxu0 0
        %1321 = vmatpush.bf16.msra.mxu0 0
        %1322 = vmatpush.bf16.msra.mxu0 0
        %1323 = vmatpush.bf16.msra.mxu0 0
        %1324 = vmatpush.bf16.msra.mxu0 %v1315
        %1325 = vmatmul.bf16.gmra.mxu0 %v1291
        %v1326 = vpop.f32.mrf.mxu0
        %v1327 = vadd.f32 0.0, %v1326
        %v1328 = vpop.f32.mrf.mxu0
        %v1329 = vadd.f32 0.0, %v1328
        %1330 = vmatmul.bf16.gmra.mxu0 %v1294
        %v1331 = vpop.f32.mrf.mxu0
        %v1332 = vadd.f32 0.0, %v1331
        %v1333 = vpop.f32.mrf.mxu0
        %v1334 = vadd.f32 0.0, %v1333
        %1335 = vmatmul.bf16.gmra.mxu0 %v1297
        %v1336 = vpop.f32.mrf.mxu0
        %v1337 = vadd.f32 0.0, %v1336
        %v1338 = vpop.f32.mrf.mxu0
        %v1339 = vadd.f32 0.0, %v1338
        %1340 = vmatmul.bf16.gmra.mxu0 %v1300
        %v1341 = vpop.f32.mrf.mxu0
        %v1342 = vadd.f32 0.0, %v1341
        %v1343 = vpop.f32.mrf.mxu0
        %v1344 = vadd.f32 0.0, %v1343
        %1345 = vmatmul.bf16.gmra.mxu0 %v1303
        %v1346 = vpop.f32.mrf.mxu0
        %v1347 = vadd.f32 0.0, %v1346
        %v1348 = vpop.f32.mrf.mxu0
        %v1349 = vadd.f32 0.0, %v1348
        %1350 = vmatmul.bf16.gmra.mxu0 %v1306
        %v1351 = vpop.f32.mrf.mxu0
        %v1352 = vadd.f32 0.0, %v1351
        %v1353 = vpop.f32.mrf.mxu0
        %v1354 = vadd.f32 0.0, %v1353
        %1355 = vmatmul.bf16.gmra.mxu0 %v1309
        %v1356 = vpop.f32.mrf.mxu0
        %v1357 = vadd.f32 0.0, %v1356
        %v1358 = vpop.f32.mrf.mxu0
        %v1359 = vadd.f32 0.0, %v1358
        %1360 = vmatmul.bf16.gmra.mxu0 %v1312
        %v1361 = vpop.f32.mrf.mxu0
        %v1362 = vadd.f32 0.0, %v1361
        %v1363 = vpop.f32.mrf.mxu0
        %v1364 = vadd.f32 0.0, %v1363
        %1365 = vdwg.mxu0
        %v1366 = vadd.f32 %v1232, %v1327
        %v1367 = vadd.f32 %v1233, %v1329
        %v1368 = vadd.f32 %v1234, %v1332
        %v1369 = vadd.f32 %v1235, %v1334
        %v1370 = vadd.f32 %v1236, %v1337
        %v1371 = vadd.f32 %v1237, %v1339
        %v1372 = vadd.f32 %v1238, %v1342
        %v1373 = vadd.f32 %v1239, %v1344
        %v1374 = vadd.f32 %v1240, %v1347
        %v1375 = vadd.f32 %v1241, %v1349
        %v1376 = vadd.f32 %v1242, %v1352
        %v1377 = vadd.f32 %v1243, %v1354
        %v1378 = vadd.f32 %v1244, %v1357
        %v1379 = vadd.f32 %v1245, %v1359
        %v1380 = vadd.f32 %v1246, %v1362
        %v1381 = vadd.f32 %v1247, %v1364
        %1382 = vst [vmem:[#allocation2] sm:$0xff] %v1366
        %1383 = vst [vmem:[#allocation2 + $0x8] sm:$0xff] %v1367
        %1384 = vst [vmem:[#allocation2 + $0x10] sm:$0xff] %v1368
        %1385 = vst [vmem:[#allocation2 + $0x18] sm:$0xff] %v1369
        %1386 = vst [vmem:[#allocation2 + $0x20] sm:$0xff] %v1370
        %1387 = vst [vmem:[#allocation2 + $0x28] sm:$0xff] %v1371
        %1388 = vst [vmem:[#allocation2 + $0x30] sm:$0xff] %v1372
        %1389 = vst [vmem:[#allocation2 + $0x38] sm:$0xff] %v1373
        %1390 = vst [vmem:[#allocation2 + $0x40] sm:$0xff] %v1374
        %1391 = vst [vmem:[#allocation2 + $0x48] sm:$0xff] %v1375
        %1392 = vst [vmem:[#allocation2 + $0x50] sm:$0xff] %v1376
        %1393 = vst [vmem:[#allocation2 + $0x58] sm:$0xff] %v1377
        %1394 = vst [vmem:[#allocation2 + $0x60] sm:$0xff] %v1378
        %1395 = vst [vmem:[#allocation2 + $0x68] sm:$0xff] %v1379
        %1396 = vst [vmem:[#allocation2 + $0x70] sm:$0xff] %v1380
        %1397 = vst [vmem:[#allocation2 + $0x78] sm:$0xff] %v1381
        %v1398 = vld [vmem:[#allocation2] sm:$0xff]
        %v1399 = vld [vmem:[#allocation2 + $0x8] sm:$0xff]
        %v1400 = vld [vmem:[#allocation2 + $0x10] sm:$0xff]
        %v1401 = vld [vmem:[#allocation2 + $0x18] sm:$0xff]
        %v1402 = vld [vmem:[#allocation2 + $0x20] sm:$0xff]
        %v1403 = vld [vmem:[#allocation2 + $0x28] sm:$0xff]
        %v1404 = vld [vmem:[#allocation2 + $0x30] sm:$0xff]
        %v1405 = vld [vmem:[#allocation2 + $0x38] sm:$0xff]
        %v1406 = vld [vmem:[#allocation2 + $0x40] sm:$0xff]
        %v1407 = vld [vmem:[#allocation2 + $0x48] sm:$0xff]
        %v1408 = vld [vmem:[#allocation2 + $0x50] sm:$0xff]
        %v1409 = vld [vmem:[#allocation2 + $0x58] sm:$0xff]
        %v1410 = vld [vmem:[#allocation2 + $0x60] sm:$0xff]
        %v1411 = vld [vmem:[#allocation2 + $0x68] sm:$0xff]
        %v1412 = vld [vmem:[#allocation2 + $0x70] sm:$0xff]
        %v1413 = vld [vmem:[#allocation2 + $0x78] sm:$0xff]
        %s1414 = scalar_lea.vmem %s1, 10
        %v1415 = vld [vmem:[%s1414] sm:$0x3]
        %v1418 = vunpack.c.l.b16 %v439
        %v1419 = vunpack.c.l.b16 %v440
        %v1420 = vpack.c.b16 %v1419, %v1418
        %v1422 = vsel %vm516, %v1420, 0
        %v1425 = vsel %vm541, %v1415, 0
        %1427 = vmatpush.bf16.msra.mxu0 0
        %1428 = vmatpush.bf16.msra.mxu0 0
        %1429 = vmatpush.bf16.msra.mxu0 0
        %1430 = vmatpush.bf16.msra.mxu0 0
        %1431 = vmatpush.bf16.msra.mxu0 0
        %1432 = vmatpush.bf16.msra.mxu0 0
        %1433 = vmatpush.bf16.msra.mxu0 0
        %1434 = vmatpush.bf16.msra.mxu0 %v1425
        %1435 = vmatmul.bf16.gmra.mxu0 %v1294
        %v1436 = vpop.f32.mrf.mxu0
        %v1437 = vadd.f32 0.0, %v1436
        %v1438 = vpop.f32.mrf.mxu0
        %v1439 = vadd.f32 0.0, %v1438
        %1440 = vmatmul.bf16.gmra.mxu0 %v1297
        %v1441 = vpop.f32.mrf.mxu0
        %v1442 = vadd.f32 0.0, %v1441
        %v1443 = vpop.f32.mrf.mxu0
        %v1444 = vadd.f32 0.0, %v1443
        %1445 = vmatmul.bf16.gmra.mxu0 %v1300
        %v1446 = vpop.f32.mrf.mxu0
        %v1447 = vadd.f32 0.0, %v1446
        %v1448 = vpop.f32.mrf.mxu0
        %v1449 = vadd.f32 0.0, %v1448
        %1450 = vmatmul.bf16.gmra.mxu0 %v1303
        %v1451 = vpop.f32.mrf.mxu0
        %v1452 = vadd.f32 0.0, %v1451
        %v1453 = vpop.f32.mrf.mxu0
        %v1454 = vadd.f32 0.0, %v1453
        %1455 = vmatmul.bf16.gmra.mxu0 %v1306
        %v1456 = vpop.f32.mrf.mxu0
        %v1457 = vadd.f32 0.0, %v1456
        %v1458 = vpop.f32.mrf.mxu0
        %v1459 = vadd.f32 0.0, %v1458
        %1460 = vmatmul.bf16.gmra.mxu0 %v1309
        %v1461 = vpop.f32.mrf.mxu0
        %v1462 = vadd.f32 0.0, %v1461
        %v1463 = vpop.f32.mrf.mxu0
        %v1464 = vadd.f32 0.0, %v1463
        %1465 = vmatmul.bf16.gmra.mxu0 %v1312
        %v1466 = vpop.f32.mrf.mxu0
        %v1467 = vadd.f32 0.0, %v1466
        %v1468 = vpop.f32.mrf.mxu0
        %v1469 = vadd.f32 0.0, %v1468
        %1470 = vmatmul.bf16.gmra.mxu0 %v1422
        %v1471 = vpop.f32.mrf.mxu0
        %v1472 = vadd.f32 0.0, %v1471
        %v1473 = vpop.f32.mrf.mxu0
        %v1474 = vadd.f32 0.0, %v1473
        %1475 = vdwg.mxu0
        %v1476 = vadd.f32 %v1398, %v1437
        %v1477 = vadd.f32 %v1399, %v1439
        %v1478 = vadd.f32 %v1400, %v1442
        %v1479 = vadd.f32 %v1401, %v1444
        %v1480 = vadd.f32 %v1402, %v1447
        %v1481 = vadd.f32 %v1403, %v1449
        %v1482 = vadd.f32 %v1404, %v1452
        %v1483 = vadd.f32 %v1405, %v1454
        %v1484 = vadd.f32 %v1406, %v1457
        %v1485 = vadd.f32 %v1407, %v1459
        %v1486 = vadd.f32 %v1408, %v1462
        %v1487 = vadd.f32 %v1409, %v1464
        %v1488 = vadd.f32 %v1410, %v1467
        %v1489 = vadd.f32 %v1411, %v1469
        %v1490 = vadd.f32 %v1412, %v1472
        %v1491 = vadd.f32 %v1413, %v1474
        %1492 = vst [vmem:[#allocation2] sm:$0xff] %v1476
        %1493 = vst [vmem:[#allocation2 + $0x8] sm:$0xff] %v1477
        %1494 = vst [vmem:[#allocation2 + $0x10] sm:$0xff] %v1478
        %1495 = vst [vmem:[#allocation2 + $0x18] sm:$0xff] %v1479
        %1496 = vst [vmem:[#allocation2 + $0x20] sm:$0xff] %v1480
        %1497 = vst [vmem:[#allocation2 + $0x28] sm:$0xff] %v1481
        %1498 = vst [vmem:[#allocation2 + $0x30] sm:$0xff] %v1482
        %1499 = vst [vmem:[#allocation2 + $0x38] sm:$0xff] %v1483
        %1500 = vst [vmem:[#allocation2 + $0x40] sm:$0xff] %v1484
        %1501 = vst [vmem:[#allocation2 + $0x48] sm:$0xff] %v1485
        %1502 = vst [vmem:[#allocation2 + $0x50] sm:$0xff] %v1486
        %1503 = vst [vmem:[#allocation2 + $0x58] sm:$0xff] %v1487
        %1504 = vst [vmem:[#allocation2 + $0x60] sm:$0xff] %v1488
        %1505 = vst [vmem:[#allocation2 + $0x68] sm:$0xff] %v1489
        %1506 = vst [vmem:[#allocation2 + $0x70] sm:$0xff] %v1490
        %1507 = vst [vmem:[#allocation2 + $0x78] sm:$0xff] %v1491
        %v1508 = vld [vmem:[#allocation2] sm:$0xff]
        %v1509 = vld [vmem:[#allocation2 + $0x8] sm:$0xff]
        %v1510 = vld [vmem:[#allocation2 + $0x10] sm:$0xff]
        %v1511 = vld [vmem:[#allocation2 + $0x18] sm:$0xff]
        %v1512 = vld [vmem:[#allocation2 + $0x20] sm:$0xff]
        %v1513 = vld [vmem:[#allocation2 + $0x28] sm:$0xff]
        %v1514 = vld [vmem:[#allocation2 + $0x30] sm:$0xff]
        %v1515 = vld [vmem:[#allocation2 + $0x38] sm:$0xff]
        %v1516 = vld [vmem:[#allocation2 + $0x40] sm:$0xff]
        %v1517 = vld [vmem:[#allocation2 + $0x48] sm:$0xff]
        %v1518 = vld [vmem:[#allocation2 + $0x50] sm:$0xff]
        %v1519 = vld [vmem:[#allocation2 + $0x58] sm:$0xff]
        %v1520 = vld [vmem:[#allocation2 + $0x60] sm:$0xff]
        %v1521 = vld [vmem:[#allocation2 + $0x68] sm:$0xff]
        %v1522 = vld [vmem:[#allocation2 + $0x70] sm:$0xff]
        %v1523 = vld [vmem:[#allocation2 + $0x78] sm:$0xff]
        %s1524 = scalar_lea.vmem %s1, 16
        %v1525 = vld [vmem:[%s1524] sm:$0x3]
        %v1528 = vunpack.c.l.b16 %v441
        %v1529 = vunpack.c.l.b16 %v442
        %v1530 = vpack.c.b16 %v1529, %v1528
        %v1532 = vsel %vm516, %v1530, 0
        %v1535 = vsel %vm541, %v1525, 0
        %1537 = vmatpush.bf16.msra.mxu0 0
        %1538 = vmatpush.bf16.msra.mxu0 0
        %1539 = vmatpush.bf16.msra.mxu0 0
        %1540 = vmatpush.bf16.msra.mxu0 0
        %1541 = vmatpush.bf16.msra.mxu0 0
        %1542 = vmatpush.bf16.msra.mxu0 0
        %1543 = vmatpush.bf16.msra.mxu0 0
        %1544 = vmatpush.bf16.msra.mxu0 %v1535
        %1545 = vmatmul.bf16.gmra.mxu0 %v1297
        %v1546 = vpop.f32.mrf.mxu0
        %v1547 = vadd.f32 0.0, %v1546
        %v1548 = vpop.f32.mrf.mxu0
        %v1549 = vadd.f32 0.0, %v1548
        %1550 = vmatmul.bf16.gmra.mxu0 %v1300
        %v1551 = vpop.f32.mrf.mxu0
        %v1552 = vadd.f32 0.0, %v1551
        %v1553 = vpop.f32.mrf.mxu0
        %v1554 = vadd.f32 0.0, %v1553
        %1555 = vmatmul.bf16.gmra.mxu0 %v1303
        %v1556 = vpop.f32.mrf.mxu0
        %v1557 = vadd.f32 0.0, %v1556
        %v1558 = vpop.f32.mrf.mxu0
        %v1559 = vadd.f32 0.0, %v1558
        %1560 = vmatmul.bf16.gmra.mxu0 %v1306
        %v1561 = vpop.f32.mrf.mxu0
        %v1562 = vadd.f32 0.0, %v1561
        %v1563 = vpop.f32.mrf.mxu0
        %v1564 = vadd.f32 0.0, %v1563
        %1565 = vmatmul.bf16.gmra.mxu0 %v1309
        %v1566 = vpop.f32.mrf.mxu0
        %v1567 = vadd.f32 0.0, %v1566
        %v1568 = vpop.f32.mrf.mxu0
        %v1569 = vadd.f32 0.0, %v1568
        %1570 = vmatmul.bf16.gmra.mxu0 %v1312
        %v1571 = vpop.f32.mrf.mxu0
        %v1572 = vadd.f32 0.0, %v1571
        %v1573 = vpop.f32.mrf.mxu0
        %v1574 = vadd.f32 0.0, %v1573
        %1575 = vmatmul.bf16.gmra.mxu0 %v1422
        %v1576 = vpop.f32.mrf.mxu0
        %v1577 = vadd.f32 0.0, %v1576
        %v1578 = vpop.f32.mrf.mxu0
        %v1579 = vadd.f32 0.0, %v1578
        %1580 = vmatmul.bf16.gmra.mxu0 %v1532
        %v1581 = vpop.f32.mrf.mxu0
        %v1582 = vadd.f32 0.0, %v1581
        %v1583 = vpop.f32.mrf.mxu0
        %v1584 = vadd.f32 0.0, %v1583
        %1585 = vdwg.mxu0
        %v1586 = vadd.f32 %v1508, %v1547
        %v1587 = vadd.f32 %v1509, %v1549
        %v1588 = vadd.f32 %v1510, %v1552
        %v1589 = vadd.f32 %v1511, %v1554
        %v1590 = vadd.f32 %v1512, %v1557
        %v1591 = vadd.f32 %v1513, %v1559
        %v1592 = vadd.f32 %v1514, %v1562
        %v1593 = vadd.f32 %v1515, %v1564
        %v1594 = vadd.f32 %v1516, %v1567
        %v1595 = vadd.f32 %v1517, %v1569
        %v1596 = vadd.f32 %v1518, %v1572
        %v1597 = vadd.f32 %v1519, %v1574
        %v1598 = vadd.f32 %v1520, %v1577
        %v1599 = vadd.f32 %v1521, %v1579
        %v1600 = vadd.f32 %v1522, %v1582
        %v1601 = vadd.f32 %v1523, %v1584
        %1602 = vst [vmem:[#allocation2] sm:$0xff] %v1586
        %1603 = vst [vmem:[#allocation2 + $0x8] sm:$0xff] %v1587
        %1604 = vst [vmem:[#allocation2 + $0x10] sm:$0xff] %v1588
        %1605 = vst [vmem:[#allocation2 + $0x18] sm:$0xff] %v1589
        %1606 = vst [vmem:[#allocation2 + $0x20] sm:$0xff] %v1590
        %1607 = vst [vmem:[#allocation2 + $0x28] sm:$0xff] %v1591
        %1608 = vst [vmem:[#allocation2 + $0x30] sm:$0xff] %v1592
        %1609 = vst [vmem:[#allocation2 + $0x38] sm:$0xff] %v1593
        %1610 = vst [vmem:[#allocation2 + $0x40] sm:$0xff] %v1594
        %1611 = vst [vmem:[#allocation2 + $0x48] sm:$0xff] %v1595
        %1612 = vst [vmem:[#allocation2 + $0x50] sm:$0xff] %v1596
        %1613 = vst [vmem:[#allocation2 + $0x58] sm:$0xff] %v1597
        %1614 = vst [vmem:[#allocation2 + $0x60] sm:$0xff] %v1598
        %1615 = vst [vmem:[#allocation2 + $0x68] sm:$0xff] %v1599
        %1616 = vst [vmem:[#allocation2 + $0x70] sm:$0xff] %v1600
        %1617 = vst [vmem:[#allocation2 + $0x78] sm:$0xff] %v1601
        %v1618 = vld [vmem:[#allocation2] sm:$0xff]
        %v1619 = vld [vmem:[#allocation2 + $0x8] sm:$0xff]
        %v1620 = vld [vmem:[#allocation2 + $0x10] sm:$0xff]
        %v1621 = vld [vmem:[#allocation2 + $0x18] sm:$0xff]
        %v1622 = vld [vmem:[#allocation2 + $0x20] sm:$0xff]
        %v1623 = vld [vmem:[#allocation2 + $0x28] sm:$0xff]
        %v1624 = vld [vmem:[#allocation2 + $0x30] sm:$0xff]
        %v1625 = vld [vmem:[#allocation2 + $0x38] sm:$0xff]
        %v1626 = vld [vmem:[#allocation2 + $0x40] sm:$0xff]
        %v1627 = vld [vmem:[#allocation2 + $0x48] sm:$0xff]
        %v1628 = vld [vmem:[#allocation2 + $0x50] sm:$0xff]
        %v1629 = vld [vmem:[#allocation2 + $0x58] sm:$0xff]
        %v1630 = vld [vmem:[#allocation2 + $0x60] sm:$0xff]
        %v1631 = vld [vmem:[#allocation2 + $0x68] sm:$0xff]
        %v1632 = vld [vmem:[#allocation2 + $0x70] sm:$0xff]
        %v1633 = vld [vmem:[#allocation2 + $0x78] sm:$0xff]
        %v1634 = vld [vmem:[%s2] sm:$0x1]
        %v1636 = vperm.slane %v1634, 0
        %v1638 = vmul.f32 %v1618, %v1636
        %v1639 = vmul.f32 %v1619, %v1636
        %v1640 = vmul.f32 %v1620, %v1636
        %v1641 = vmul.f32 %v1621, %v1636
        %v1642 = vmul.f32 %v1622, %v1636
        %v1643 = vmul.f32 %v1623, %v1636
        %v1644 = vmul.f32 %v1624, %v1636
        %v1645 = vmul.f32 %v1625, %v1636
        %v1646 = vmul.f32 %v1626, %v1636
        %v1647 = vmul.f32 %v1627, %v1636
        %v1648 = vmul.f32 %v1628, %v1636
        %v1649 = vmul.f32 %v1629, %v1636
        %v1650 = vmul.f32 %v1630, %v1636
        %v1651 = vmul.f32 %v1631, %v1636
        %v1652 = vmul.f32 %v1632, %v1636
        %v1653 = vmul.f32 %v1633, %v1636
        %v1654 = vld [vmem:[%s3] sm:$0x1]
        %v1656 = vperm.slane %v1654, 0
        %v1658 = vadd.f32 %v1638, %v1656
        %v1659 = vadd.f32 %v1639, %v1656
        %v1660 = vadd.f32 %v1640, %v1656
        %v1661 = vadd.f32 %v1641, %v1656
        %v1662 = vadd.f32 %v1642, %v1656
        %v1663 = vadd.f32 %v1643, %v1656
        %v1664 = vadd.f32 %v1644, %v1656
        %v1665 = vadd.f32 %v1645, %v1656
        %v1666 = vadd.f32 %v1646, %v1656
        %v1667 = vadd.f32 %v1647, %v1656
        %v1668 = vadd.f32 %v1648, %v1656
        %v1669 = vadd.f32 %v1649, %v1656
        %v1670 = vadd.f32 %v1650, %v1656
        %v1671 = vadd.f32 %v1651, %v1656
        %v1672 = vadd.f32 %v1652, %v1656
        %v1673 = vadd.f32 %v1653, %v1656
        %v1674 = vmax.f32 %v1658, 0.0
        %v1675 = vmax.f32 %v1659, 0.0
        %v1676 = vmax.f32 %v1660, 0.0
        %v1677 = vmax.f32 %v1661, 0.0
        %v1678 = vmax.f32 %v1662, 0.0
        %v1679 = vmax.f32 %v1663, 0.0
        %v1680 = vmax.f32 %v1664, 0.0
        %v1681 = vmax.f32 %v1665, 0.0
        %v1682 = vmax.f32 %v1666, 0.0
        %v1683 = vmax.f32 %v1667, 0.0
        %v1684 = vmax.f32 %v1668, 0.0
        %v1685 = vmax.f32 %v1669, 0.0
        %v1686 = vmax.f32 %v1670, 0.0
        %v1687 = vmax.f32 %v1671, 0.0
        %v1688 = vmax.f32 %v1672, 0.0
        %v1689 = vmax.f32 %v1673, 0.0
        %1690 = vst [vmem:[%s214] sm:$0xff] %v1674
        %1691 = vst [vmem:[%s214 + $0x8] sm:$0xff] %v1675
        %1692 = vst [vmem:[%s214 + $0x10] sm:$0xff] %v1676
        %1693 = vst [vmem:[%s214 + $0x18] sm:$0xff] %v1677
        %1694 = vst [vmem:[%s214 + $0x20] sm:$0xff] %v1678
        %1695 = vst [vmem:[%s214 + $0x28] sm:$0xff] %v1679
        %1696 = vst [vmem:[%s214 + $0x30] sm:$0xff] %v1680
        %1697 = vst [vmem:[%s214 + $0x38] sm:$0xff] %v1681
        %1698 = vst [vmem:[%s214 + $0x40] sm:$0xff] %v1682
        %1699 = vst [vmem:[%s214 + $0x48] sm:$0xff] %v1683
        %1700 = vst [vmem:[%s214 + $0x50] sm:$0xff] %v1684
        %1701 = vst [vmem:[%s214 + $0x58] sm:$0xff] %v1685
        %1702 = vst [vmem:[%s214 + $0x60] sm:$0xff] %v1686
        %1703 = vst [vmem:[%s214 + $0x68] sm:$0xff] %v1687
        %1704 = vst [vmem:[%s214 + $0x70] sm:$0xff] %v1688
        %1705 = vst [vmem:[%s214 + $0x78] sm:$0xff] %v1689
        %s1706 = sand.u32 %s131, 1
        %s1707 = scalar_lea.sflag [#allocation4], %s1706
        %s1708 = sand.u32 %s131, 1
        %s1709 = smul.addr %s1708, 128
        %s1710 = scalar_lea.vmem [#allocation3], %s1709
        // Predicated region
        $region37: #{tpu_custom_call.1} parent=35 // pred_check
          %p1711 = pneg %p141
        $region38: #{tpu_custom_call.1} parent=35 // pred_check_branch
          %1713 = sbr.rel (%p1711) target = $region40
        $region39: #{tpu_custom_call.1} parent=35 // pred_region
          %s1714 = smul.u32 8, %s23
          %1716 = vsyncadd %s1707, 0
          %s1717 = smul.addr %s1714, 2
          %s1718 = smul.addr %s22, 32
          %s1719 = sadd.s32 %s1717, %s1718
          %s1720 = smul.addr %s1719, 8
          %s1721 = scalar_lea.hbm %s4, %s1720
          %s1722 = sshll.u32 %s1710, 4
          %s1723 = int_to_ptr.vmem [resolvable:$true] %s1722
          %s1724 = sshll.u32 %s1721, 4
          %s1725 = int_to_ptr.hbm [resolvable:$true] %s1724
          %1730 = dma.vmem_to_hbm [thread:$0]  %s1723, 2048, %s1725, %s1707, 128, 128, 8
        $region40: #{tpu_custom_call.1} parent=35 // pred_fallthru
          _
      $region36: #{tpu_custom_call.1} parent=5 // pred_fallthru
        _
      %p1731 = scmp.le.s32.totalorder 2, %s13
      // Predicated region
      $region41: #{tpu_custom_call.1} parent=5 // pred_check
        %p1732 = pneg %p1731
      $region42: #{tpu_custom_call.1} parent=5 // pred_check_branch
        %1734 = sbr.rel (%p1732) target = $region44
      $region43: #{tpu_custom_call.1} parent=5 // pred_region
        %s1735 = ssub.s32 %s13, 2
        // Predicated region
        $region45: #{tpu_custom_call.1} parent=43 // pred_check
          %p1736 = pneg %p147
        $region46: #{tpu_custom_call.1} parent=43 // pred_check_branch
          %1738 = sbr.rel (%p1736) target = $region48
        $region47: #{tpu_custom_call.1} parent=43 // pred_region
          %s1739 = sand.u32 %s132, 1
          %s1740 = scalar_lea.sflag [#allocation4], %s1739
          %s1741 = sand.u32 %s132, 1
          %s1742 = smul.addr %s1741, 128
          %s1743 = scalar_lea.vmem [#allocation3], %s1742
          %1745 = dma.done %s1740, 2048
        $region48: #{tpu_custom_call.1} parent=43 // pred_fallthru
          _
      $region44: #{tpu_custom_call.1} parent=5 // pred_fallthru
        _
    $region6: #{tpu_custom_call.1} parent=1 // loop_footer
      %s17 = sadd.s32 1, %s13
    $region7: #{tpu_custom_call.1} parent=1 // loop_footer_branch
      %12 = sbr.rel target = $region3
    $region8: #{tpu_custom_call.1} parent=1 // loop_exit
      _
    %1746 = vsyncpa [#allocation4], 1
    %s1747 = scalar_lea.sflag [#allocation4], 1
    %1748 = vsyncpa %s1747, 1

</llo_original>
